<compile_context>
chip_gen: v7x
topology: tpu7x:2x2x1
jax: 0.10.0
libtpu: 0.0.40
codegen_flags: <defaults>
</compile_context>

<pallas_src>
import jax
import jax.numpy as jnp
from jax.experimental import pallas as pl
from jax.experimental.pallas import tpu as pltpu


def _round_up(v, m):
    return ((v + m - 1) // m) * m


def _mlp_kernel(x_ref, w_ref, b_ref, out_ref):
    """Fused forward over one batch tile.

    x_ref:   (tile_B, PAD)        input rows, zero-padded to PAD lanes
    w_ref:   (L, PAD, PAD)        all layer weights, zero-padded, VMEM-resident
    b_ref:   (L, PAD)             all biases (f32), zero-padded, VMEM-resident
    out_ref: (tile_B, PAD)        lane-dense output slab; column 0 holds the result
    """
    n_layers = w_ref.shape[0]
    cdt = w_ref.dtype                       # matmul input dtype (bf16 or f32)

    b_all = b_ref[...]                      # (L, PAD) f32
    h = x_ref[...]                          # (tile_B, PAD) in cdt

    for i in range(n_layers):               # static unroll (6 layers)
        y = jnp.dot(h.astype(cdt), w_ref[i],
                    preferred_element_type=jnp.float32)
        y = y + b_all[i][None, :]           # f32 bias add
        if i < n_layers - 1:
            h = jnp.maximum(y, 0.0)         # ReLU; Dropout is identity (eval)
        else:
            h = y                           # output layer: no activation

    out_ref[...] = h.astype(out_ref.dtype)  # lane-dense (tile_B, PAD) store


def optimize_net_forward(x, params, *, block_b=256, compute_dtype=jnp.bfloat16):
    """x: (B, n_inputs) float32. params: dict name -> (W (in,out), b (out,)).
    Returns (B,) float32 (matches `self.out(x).squeeze()` for B > 1)."""
    B, n_in = x.shape

    hidden_names = [n for n in ("fc1", "fc2", "fc3", "fc4", "fc5",
                                "fc6", "fc7", "fc8", "fc9", "fc10") if n in params]
    names = hidden_names + ["out"]
    L = len(names)

    # Uniform lane padding for every layer (multiple of 128).
    max_dim = max([n_in, 1] + [d for n in names for d in params[n][0].shape])
    PAD = _round_up(max_dim, 128)

    # Consolidate weights / biases into two slabs (3 total input DMAs incl. x).
    w_slab = jnp.zeros((L, PAD, PAD), compute_dtype)
    b_slab = jnp.zeros((L, PAD), jnp.float32)
    for i, n in enumerate(names):
        w, b = params[n]
        w_slab = w_slab.at[i, :w.shape[0], :w.shape[1]].set(w.astype(compute_dtype))
        b_slab = b_slab.at[i, :b.shape[0]].set(b.astype(jnp.float32))

    # Batch tiling: tile is a multiple of 8 sublanes; pad B up to a multiple of it.
    tile_b = min(block_b, _round_up(B, 8))
    B_pad = _round_up(B, tile_b)
    x_pad = jnp.zeros((B_pad, PAD), compute_dtype)
    x_pad = x_pad.at[:B, :n_in].set(x.astype(compute_dtype))

    grid = (B_pad // tile_b,)
    itemsize = jnp.dtype(compute_dtype).itemsize
    cost = pl.CostEstimate(
        flops=2 * B_pad * L * PAD * PAD,
        transcendentals=0,
        bytes_accessed=(B_pad * PAD * itemsize          # x
                        + L * PAD * PAD * itemsize      # weights
                        + L * PAD * 4                   # biases
                        + B_pad * PAD * 4))             # output

    out = pl.pallas_call(
        _mlp_kernel,
        out_shape=jax.ShapeDtypeStruct((B_pad, PAD), jnp.float32),
        grid=grid,
        in_specs=[
            pl.BlockSpec((tile_b, PAD), lambda i: (i, 0)),      # x: blocked over batch
            pl.BlockSpec((L, PAD, PAD), lambda i: (0, 0, 0)),   # weights: VMEM-resident
            pl.BlockSpec((L, PAD), lambda i: (0, 0)),           # biases:  VMEM-resident
        ],
        out_specs=pl.BlockSpec((tile_b, PAD), lambda i: (i, 0)),
        compiler_params=pltpu.CompilerParams(
            dimension_semantics=("parallel",),          # v7x: shard batch over 2 TCs
            vmem_limit_bytes=32 * 1024 * 1024,          # headroom for v7x's 64 MiB VMEM
        ),
        cost_estimate=cost,
    )(x_pad, w_slab, b_slab)

    return out[:B, 0]


def _init_linear(key, fan_in, fan_out):
    """torch.nn.Linear-style init (uniform +/- 1/sqrt(fan_in)); W stored as (in, out)."""
    kw, kb = jax.random.split(key)
    bound = 1.0 / jnp.sqrt(jnp.asarray(fan_in, jnp.float32))
    w = jax.random.uniform(kw, (fan_in, fan_out), jnp.float32, -bound, bound)
    b = jax.random.uniform(kb, (fan_out,), jnp.float32, -bound, bound)
    return w, b


def make_params(key, n_inputs, h1, h2, h3, h4, h5):
    sizes = [(n_inputs, h1), (h1, h2), (h2, h3), (h3, h4), (h4, h5), (h5, 1)]
    names = ["fc1", "fc2", "fc3", "fc4", "fc5", "out"]
    keys = jax.random.split(key, len(sizes))
    return {n: _init_linear(k, fi, fo) for n, k, (fi, fo) in zip(names, keys, sizes)}


if __name__ == "__main__":
    key = jax.random.PRNGKey(0)
    k_x, k_p = jax.random.split(key)

    # Small shapes consistent with the module: hidden_layer1..5 > 0, hidden_layer6..10 == 0.
    # batch=300 exercises batch tiling (grid of 2 tiles of 256) and row padding/slicing.
    batch, n_inputs = 300, 32
    h1, h2, h3, h4, h5 = 64, 64, 32, 32, 16

    x = jax.random.normal(k_x, (batch, n_inputs), jnp.float32)
    params = make_params(k_p, n_inputs, h1, h2, h3, h4, h5)

    # f32 compute path (tight check) and bf16 matmul-input path (perf default on v6e/v7x).
    y_f32 = optimize_net_forward(x, params, compute_dtype=jnp.float32)
    y_bf16 = optimize_net_forward(x, params, compute_dtype=jnp.bfloat16)
    jax.block_until_ready((y_f32, y_bf16))

    # Pure-JAX reference.
    h = x
    for name in ("fc1", "fc2", "fc3", "fc4", "fc5"):
        w, b = params[name]
        h = jnp.maximum(h @ w + b, 0.0)
    wo, bo = params["out"]
    y_ref = jnp.squeeze(h @ wo + bo, axis=-1)

    assert y_f32.shape == (batch,)
    assert y_bf16.shape == (batch,)
    assert jnp.allclose(y_f32, y_ref, atol=1e-4, rtol=1e-4)
    assert jnp.allclose(y_bf16, y_ref, atol=5e-2, rtol=5e-2)

    print("KERNEL_OK")
</pallas_src>

<mosaic_0001>
module attributes {stable_mosaic.version = 11 : i64} {
  func.func @_mlp_kernel(%arg0: i32, %arg1: memref<256x128xf32, #tpu.memory_space<vmem>>, %arg2: memref<6x128x128xf32, #tpu.memory_space<vmem>>, %arg3: memref<6x128xf32, #tpu.memory_space<vmem>>, %arg4: memref<256x128xf32, #tpu.memory_space<vmem>>) attributes {dimension_semantics = [#tpu.dimension_semantics<parallel>], iteration_bounds = array<i64: 2>, scalar_prefetch = 0 : i64, scratch_operands = 0 : i64, tpu.core_type = #tpu.core_type<tc>, window_params = [{transform_indices = @transform_0, window_bounds = array<i64: 256, 128>}, {pipeline_mode = #tpu.pipeline_mode<synchronous>, transform_indices = @transform_1, window_bounds = array<i64: 6, 128, 128>}, {pipeline_mode = #tpu.pipeline_mode<synchronous>, transform_indices = @transform_2, window_bounds = array<i64: 6, 128>}, {transform_indices = @transform_3, window_bounds = array<i64: 256, 128>}]} {
    %c0 = arith.constant 0 : index
    %c0_0 = arith.constant 0 : index
    %0 = vector.load %arg3[%c0, %c0_0] : memref<6x128xf32, #tpu.memory_space<vmem>>, vector<6x128xf32>
    %c0_1 = arith.constant 0 : index
    %c0_2 = arith.constant 0 : index
    %1 = vector.load %arg1[%c0_1, %c0_2] : memref<256x128xf32, #tpu.memory_space<vmem>>, vector<256x128xf32>
    %c0_3 = arith.constant 0 : index
    %c0_4 = arith.constant 0 : index
    %c0_5 = arith.constant 0 : index
    %2 = vector.load %arg2[%c0_3, %c0_4, %c0_5] : memref<6x128x128xf32, #tpu.memory_space<vmem>>, vector<1x128x128xf32>
    %3 = vector.shape_cast %2 : vector<1x128x128xf32> to vector<128x128xf32>
    %cst = arith.constant dense<0.000000e+00> : vector<256x128xf32>
    %4 = tpu.matmul %1, %3, %cst {dimension_numbers = #tpu.dot_dimension_numbers<[1], [0], [0], [1], [0, 0, 1, 1], [], []>} : vector<256x128xf32>, vector<128x128xf32>, vector<256x128xf32> -> vector<256x128xf32>
    %5 = vector.extract_strided_slice %0 {offsets = [0, 0], sizes = [1, 128], strides = [1, 1]} : vector<6x128xf32> to vector<1x128xf32>
    %6 = vector.shape_cast %5 : vector<1x128xf32> to vector<128xf32>
    %7 = vector.shape_cast %6 : vector<128xf32> to vector<1x128xf32>
    %8 = vector.broadcast %7 : vector<1x128xf32> to vector<256x128xf32>
    %9 = arith.addf %4, %8 : vector<256x128xf32>
    %cst_6 = arith.constant 0.000000e+00 : f32
    %10 = vector.broadcast %cst_6 : f32 to vector<256x128xf32>
    %11 = arith.maximumf %9, %10 : vector<256x128xf32>
    %c1 = arith.constant 1 : index
    %c0_7 = arith.constant 0 : index
    %c0_8 = arith.constant 0 : index
    %12 = vector.load %arg2[%c1, %c0_7, %c0_8] : memref<6x128x128xf32, #tpu.memory_space<vmem>>, vector<1x128x128xf32>
    %13 = vector.shape_cast %12 : vector<1x128x128xf32> to vector<128x128xf32>
    %cst_9 = arith.constant dense<0.000000e+00> : vector<256x128xf32>
    %14 = tpu.matmul %11, %13, %cst_9 {dimension_numbers = #tpu.dot_dimension_numbers<[1], [0], [0], [1], [0, 0, 1, 1], [], []>} : vector<256x128xf32>, vector<128x128xf32>, vector<256x128xf32> -> vector<256x128xf32>
    %15 = vector.extract_strided_slice %0 {offsets = [1, 0], sizes = [1, 128], strides = [1, 1]} : vector<6x128xf32> to vector<1x128xf32>
    %16 = vector.shape_cast %15 : vector<1x128xf32> to vector<128xf32>
    %17 = vector.shape_cast %16 : vector<128xf32> to vector<1x128xf32>
    %18 = vector.broadcast %17 : vector<1x128xf32> to vector<256x128xf32>
    %19 = arith.addf %14, %18 : vector<256x128xf32>
    %cst_10 = arith.constant 0.000000e+00 : f32
    %20 = vector.broadcast %cst_10 : f32 to vector<256x128xf32>
    %21 = arith.maximumf %19, %20 : vector<256x128xf32>
    %c2 = arith.constant 2 : index
    %c0_11 = arith.constant 0 : index
    %c0_12 = arith.constant 0 : index
    %22 = vector.load %arg2[%c2, %c0_11, %c0_12] : memref<6x128x128xf32, #tpu.memory_space<vmem>>, vector<1x128x128xf32>
    %23 = vector.shape_cast %22 : vector<1x128x128xf32> to vector<128x128xf32>
    %cst_13 = arith.constant dense<0.000000e+00> : vector<256x128xf32>
    %24 = tpu.matmul %21, %23, %cst_13 {dimension_numbers = #tpu.dot_dimension_numbers<[1], [0], [0], [1], [0, 0, 1, 1], [], []>} : vector<256x128xf32>, vector<128x128xf32>, vector<256x128xf32> -> vector<256x128xf32>
    %25 = vector.extract_strided_slice %0 {offsets = [2, 0], sizes = [1, 128], strides = [1, 1]} : vector<6x128xf32> to vector<1x128xf32>
    %26 = vector.shape_cast %25 : vector<1x128xf32> to vector<128xf32>
    %27 = vector.shape_cast %26 : vector<128xf32> to vector<1x128xf32>
    %28 = vector.broadcast %27 : vector<1x128xf32> to vector<256x128xf32>
    %29 = arith.addf %24, %28 : vector<256x128xf32>
    %cst_14 = arith.constant 0.000000e+00 : f32
    %30 = vector.broadcast %cst_14 : f32 to vector<256x128xf32>
    %31 = arith.maximumf %29, %30 : vector<256x128xf32>
    %c3 = arith.constant 3 : index
    %c0_15 = arith.constant 0 : index
    %c0_16 = arith.constant 0 : index
    %32 = vector.load %arg2[%c3, %c0_15, %c0_16] : memref<6x128x128xf32, #tpu.memory_space<vmem>>, vector<1x128x128xf32>
    %33 = vector.shape_cast %32 : vector<1x128x128xf32> to vector<128x128xf32>
    %cst_17 = arith.constant dense<0.000000e+00> : vector<256x128xf32>
    %34 = tpu.matmul %31, %33, %cst_17 {dimension_numbers = #tpu.dot_dimension_numbers<[1], [0], [0], [1], [0, 0, 1, 1], [], []>} : vector<256x128xf32>, vector<128x128xf32>, vector<256x128xf32> -> vector<256x128xf32>
    %35 = vector.extract_strided_slice %0 {offsets = [3, 0], sizes = [1, 128], strides = [1, 1]} : vector<6x128xf32> to vector<1x128xf32>
    %36 = vector.shape_cast %35 : vector<1x128xf32> to vector<128xf32>
    %37 = vector.shape_cast %36 : vector<128xf32> to vector<1x128xf32>
    %38 = vector.broadcast %37 : vector<1x128xf32> to vector<256x128xf32>
    %39 = arith.addf %34, %38 : vector<256x128xf32>
    %cst_18 = arith.constant 0.000000e+00 : f32
    %40 = vector.broadcast %cst_18 : f32 to vector<256x128xf32>
    %41 = arith.maximumf %39, %40 : vector<256x128xf32>
    %c4 = arith.constant 4 : index
    %c0_19 = arith.constant 0 : index
    %c0_20 = arith.constant 0 : index
    %42 = vector.load %arg2[%c4, %c0_19, %c0_20] : memref<6x128x128xf32, #tpu.memory_space<vmem>>, vector<1x128x128xf32>
    %43 = vector.shape_cast %42 : vector<1x128x128xf32> to vector<128x128xf32>
    %cst_21 = arith.constant dense<0.000000e+00> : vector<256x128xf32>
    %44 = tpu.matmul %41, %43, %cst_21 {dimension_numbers = #tpu.dot_dimension_numbers<[1], [0], [0], [1], [0, 0, 1, 1], [], []>} : vector<256x128xf32>, vector<128x128xf32>, vector<256x128xf32> -> vector<256x128xf32>
    %45 = vector.extract_strided_slice %0 {offsets = [4, 0], sizes = [1, 128], strides = [1, 1]} : vector<6x128xf32> to vector<1x128xf32>
    %46 = vector.shape_cast %45 : vector<1x128xf32> to vector<128xf32>
    %47 = vector.shape_cast %46 : vector<128xf32> to vector<1x128xf32>
    %48 = vector.broadcast %47 : vector<1x128xf32> to vector<256x128xf32>
    %49 = arith.addf %44, %48 : vector<256x128xf32>
    %cst_22 = arith.constant 0.000000e+00 : f32
    %50 = vector.broadcast %cst_22 : f32 to vector<256x128xf32>
    %51 = arith.maximumf %49, %50 : vector<256x128xf32>
    %c5 = arith.constant 5 : index
    %c0_23 = arith.constant 0 : index
    %c0_24 = arith.constant 0 : index
    %52 = vector.load %arg2[%c5, %c0_23, %c0_24] : memref<6x128x128xf32, #tpu.memory_space<vmem>>, vector<1x128x128xf32>
    %53 = vector.shape_cast %52 : vector<1x128x128xf32> to vector<128x128xf32>
    %cst_25 = arith.constant dense<0.000000e+00> : vector<256x128xf32>
    %54 = tpu.matmul %51, %53, %cst_25 {dimension_numbers = #tpu.dot_dimension_numbers<[1], [0], [0], [1], [0, 0, 1, 1], [], []>} : vector<256x128xf32>, vector<128x128xf32>, vector<256x128xf32> -> vector<256x128xf32>
    %55 = vector.extract_strided_slice %0 {offsets = [5, 0], sizes = [1, 128], strides = [1, 1]} : vector<6x128xf32> to vector<1x128xf32>
    %56 = vector.shape_cast %55 : vector<1x128xf32> to vector<128xf32>
    %57 = vector.shape_cast %56 : vector<128xf32> to vector<1x128xf32>
    %58 = vector.broadcast %57 : vector<1x128xf32> to vector<256x128xf32>
    %59 = arith.addf %54, %58 : vector<256x128xf32>
    %c0_26 = arith.constant 0 : index
    %c0_27 = arith.constant 0 : index
    %60 = vector.load %arg4[%c0_26, %c0_27] : memref<256x128xf32, #tpu.memory_space<vmem>>, vector<256x128xf32>
    tpu.vector_store %arg4[%c0_26, %c0_27], %59 {strides = array<i32>} : memref<256x128xf32, #tpu.memory_space<vmem>>, vector<256x128xf32>,
    return
  }
  func.func @transform_0(%arg0: i32) -> (i32, i32) {
    %c0_i32 = arith.constant 0 : i32
    %c0_i32_0 = arith.constant 0 : i32
    return %arg0, %c0_i32 : i32, i32
  }
  func.func @transform_1(%arg0: i32) -> (i32, i32, i32) {
    %c0_i32 = arith.constant 0 : i32
    %c0_i32_0 = arith.constant 0 : i32
    %c0_i32_1 = arith.constant 0 : i32
    %c0_i32_2 = arith.constant 0 : i32
    return %c0_i32, %c0_i32_0, %c0_i32_1 : i32, i32, i32
  }
  func.func @transform_2(%arg0: i32) -> (i32, i32) {
    %c0_i32 = arith.constant 0 : i32
    %c0_i32_0 = arith.constant 0 : i32
    %c0_i32_1 = arith.constant 0 : i32
    return %c0_i32, %c0_i32_0 : i32, i32
  }
  func.func @transform_3(%arg0: i32) -> (i32, i32) {
    %c0_i32 = arith.constant 0 : i32
    %c0_i32_0 = arith.constant 0 : i32
    return %arg0, %c0_i32 : i32, i32
  }
}

</mosaic_0001>

<llo_original>
// kernel: tpu_custom_call.1
$region0: #{tpu_custom_call.1}
  #allocation0 [shape = 'u32[]', space=smem, size = 0x4, offset = 0x4, fixed_abs, tag = 'smem constant byte address 0x4 - core index']
  #allocation1 [shape = 'u32[144,128]{1,0:T(1,128)}', space=vmem, size = 0x12000, scoped, tag = 'internal scratch']
  %s0 = inlined_call_operand.hbm [shape: f32[512,128], index: 0, kind: input, shape index: {}]
  %s1 = inlined_call_operand.hbm [shape: f32[6,128,128], index: 1, kind: input, shape index: {}]
  %s2 = inlined_call_operand.hbm [shape: f32[6,128], index: 2, kind: input, shape index: {}]
  %s3 = inlined_call_operand.hbm [shape: f32[512,128], index: 3, kind: output, shape index: {}]
  %s4 = sld [smem:[#allocation0]]
  $region57: #{tpu_custom_call.1} parent=0
    _
  %s6 = ssub.s32 1, %s4
  %s7 = scalar_select 0, %s6, %s4
  $region1: #{tpu_custom_call.1} parent=0
    #allocation2 [shape = 'u8[262144]{0}', space=vmem, size = 0x40000, scoped, tag = 'input window, operand 0']
    #allocation3 [shape = 's32[2]{0}', space=sflag, size = 0x8, scoped, tag = 'scoped memory for tpu_custom_call.1']
    #allocation4 [shape = 's32[2]{0}', space=sflag, size = 0x8, scoped, tag = 'scoped memory for tpu_custom_call.1']
    #allocation5 [shape = 'u8[393216]{0}', space=vmem, size = 0x60000, scoped, tag = 'input window, operand 1, single buffered']
    #allocation6 [shape = 's32[1]{0}', space=sflag, size = 0x4, scoped, tag = 'scoped memory for tpu_custom_call.1']
    #allocation7 [shape = 'u8[4096]{0}', space=vmem, size = 0x1000, scoped, tag = 'input window, operand 2, single buffered']
    #allocation8 [shape = 'u8[262144]{0}', space=vmem, size = 0x40000, scoped, tag = 'output window, operand 0']
    %8 = vsyncpa [#allocation3], 0
    %s9 = scalar_lea.sflag [#allocation3], 1
    %10 = vsyncpa %s9, 0
    %11 = vsyncpa [#allocation6], 0
    %12 = vsyncpa [#allocation4], 0
    %s13 = scalar_lea.sflag [#allocation4], 1
    %14 = vsyncpa %s13, 0
    loop: start=0, step=1, limit=4
    $region2: #{tpu_custom_call.1} parent=1 // loop_pre_header
      _
    $region3: #{tpu_custom_call.1} parent=1 // loop_header
      %s16 = sphi 0, %s20
      %p17 = scmp.ge.s32.totalorder %s16, 4
      %s26 = sphi 0, %s28
      %s29 = sphi 0, %s26
      %s30 = sphi 0, %s29
      %s46 = sphi 0, %s30
      %s50 = sphi 0, %s50
      %s52 = sphi 0, %s50
      %s53 = sphi 0, %s52
      %s67 = sphi 0, %s53
      %s71 = sphi 0, %s71
      %s73 = sphi 0, %s71
      %s74 = sphi 0, %s73
      %s88 = sphi 0, %s74
      %s94 = sphi 0, %s96
      %s97 = sphi 0, %s94
      %s98 = sphi 0, %s97
      %s114 = sphi 0, %s98
    $region4: #{tpu_custom_call.1} parent=1 // loop_header_branch
      %19 = sbr.rel (%p17) target = $region8
    $region5: #{tpu_custom_call.1} parent=1 // loop_body
      %s21 = ssub.s32 %s16, 1
      %s22 = ssub.s32 %s16, 2
      %s23 = sadd.s32 %s16, 1
      %s24 = ssub.s32 %s16, %s23
      %p25 = scmp.eq.s32.totalorder %s24, 0
      %s27 = sadd.s32 %s26, 1
      %s28 = scalar_select %p25, %s26, %s27
      %p31 = pneg %p25
      %p32 = scmp.eq.s32.totalorder %s16, 1
      %p33 = por %p31, %p32
      %p34 = scmp.ne.s32.totalorder %s26, %s29
      %p35 = scmp.eq.s32.totalorder %s16, 0
      %p36 = por %p34, %p35
      %p37 = scmp.ne.s32.totalorder %s26, %s29
      %p38 = scmp.eq.s32.totalorder %s21, 1
      %p39 = por %p37, %p38
      %p40 = scmp.ne.s32.totalorder %s29, %s30
      %p41 = scmp.eq.s32.totalorder %s21, 0
      %p42 = por %p40, %p41
      %p43 = scmp.ne.s32.totalorder %s29, %s30
      %p44 = scmp.eq.s32.totalorder %s22, 1
      %p45 = por %p43, %p44
      %p47 = scmp.ne.s32.totalorder %s30, %s46
      %p48 = scmp.eq.s32.totalorder %s22, 0
      %p49 = por %p47, %p48
      %s51 = sadd.s32 %s50, 1
      %p54 = scmp.eq.s32.totalorder %s16, 1
      %p55 = scmp.ne.s32.totalorder %s50, %s52
      %p56 = scmp.eq.s32.totalorder %s16, 0
      %p57 = por %p55, %p56
      %p58 = scmp.ne.s32.totalorder %s50, %s52
      %p59 = scmp.eq.s32.totalorder %s21, 1
      %p60 = por %p58, %p59
      %p61 = scmp.ne.s32.totalorder %s52, %s53
      %p62 = scmp.eq.s32.totalorder %s21, 0
      %p63 = por %p61, %p62
      %p64 = scmp.ne.s32.totalorder %s52, %s53
      %p65 = scmp.eq.s32.totalorder %s22, 1
      %p66 = por %p64, %p65
      %p68 = scmp.ne.s32.totalorder %s53, %s67
      %p69 = scmp.eq.s32.totalorder %s22, 0
      %p70 = por %p68, %p69
      %s72 = sadd.s32 %s71, 1
      %p75 = scmp.eq.s32.totalorder %s16, 1
      %p76 = scmp.ne.s32.totalorder %s71, %s73
      %p77 = scmp.eq.s32.totalorder %s16, 0
      %p78 = por %p76, %p77
      %p79 = scmp.ne.s32.totalorder %s71, %s73
      %p80 = scmp.eq.s32.totalorder %s21, 1
      %p81 = por %p79, %p80
      %p82 = scmp.ne.s32.totalorder %s73, %s74
      %p83 = scmp.eq.s32.totalorder %s21, 0
      %p84 = por %p82, %p83
      %p85 = scmp.ne.s32.totalorder %s73, %s74
      %p86 = scmp.eq.s32.totalorder %s22, 1
      %p87 = por %p85, %p86
      %p89 = scmp.ne.s32.totalorder %s74, %s88
      %p90 = scmp.eq.s32.totalorder %s22, 0
      %p91 = por %p89, %p90
      %s92 = ssub.s32 %s16, %s23
      %p93 = scmp.eq.s32.totalorder %s92, 0
      %s95 = sadd.s32 %s94, 1
      %s96 = scalar_select %p93, %s94, %s95
      %p99 = pneg %p93
      %p100 = scmp.eq.s32.totalorder %s16, 1
      %p101 = por %p99, %p100
      %p102 = scmp.ne.s32.totalorder %s94, %s97
      %p103 = scmp.eq.s32.totalorder %s16, 0
      %p104 = por %p102, %p103
      %p105 = scmp.ne.s32.totalorder %s94, %s97
      %p106 = scmp.eq.s32.totalorder %s21, 1
      %p107 = por %p105, %p106
      %p108 = scmp.ne.s32.totalorder %s97, %s98
      %p109 = scmp.eq.s32.totalorder %s21, 0
      %p110 = por %p108, %p109
      %p111 = scmp.ne.s32.totalorder %s97, %s98
      %p112 = scmp.eq.s32.totalorder %s22, 1
      %p113 = por %p111, %p112
      %p115 = scmp.ne.s32.totalorder %s98, %s114
      %p116 = scmp.eq.s32.totalorder %s22, 0
      %p117 = por %p115, %p116
      %p118 = scmp.le.s32.totalorder 1, %s16
      %p119 = scmp.lt.s32.totalorder %s16, 3
      %p120 = pnand %p118, %p119
      %p121 = pneg %p120
      // Predicated region
      $region9: #{tpu_custom_call.1} parent=5 // pred_check
        _
      $region10: #{tpu_custom_call.1} parent=5 // pred_check_branch
        %123 = sbr.rel (%p120) target = $region12
      $region11: #{tpu_custom_call.1} parent=5 // pred_region
        %s124 = ssub.s32 %s16, 1
        // Predicated region
        $region13: #{tpu_custom_call.1} parent=11 // pred_check
          %p125 = pneg %p63
        $region14: #{tpu_custom_call.1} parent=11 // pred_check_branch
          %127 = sbr.rel (%p125) target = $region16
        $region15: #{tpu_custom_call.1} parent=11 // pred_region
          %s129 = ssub.s32 12288, 12288
          %130 = vsyncadd [#allocation6], %s129
          %s131 = sshll.u32 [#allocation5], 4
          %s132 = int_to_ptr.vmem [resolvable:$true] %s131
          %137 = dma.hbm_to_vmem [thread:$0]  %s1, 12288, %s132, [#allocation6], 128, 128, 8
        $region16: #{tpu_custom_call.1} parent=11 // pred_fallthru
          _
        // Predicated region
        $region17: #{tpu_custom_call.1} parent=11 // pred_check
          %p138 = pneg %p84
        $region18: #{tpu_custom_call.1} parent=11 // pred_check_branch
          %140 = sbr.rel (%p138) target = $region20
        $region19: #{tpu_custom_call.1} parent=11 // pred_region
          %s142 = ssub.s32 128, 128
          %143 = vsyncadd [#allocation6], %s142
          %s145 = sshll.u32 [#allocation7], 4
          %s146 = int_to_ptr.vmem [resolvable:$true] %s145
          %148 = dma.hbm_to_vmem [thread:$0]  %s2, 128, %s146, [#allocation6]
        $region20: #{tpu_custom_call.1} parent=11 // pred_fallthru
          _
      $region12: #{tpu_custom_call.1} parent=5 // pred_fallthru
        _
      %p149 = scmp.lt.s32.totalorder %s16, 2
      // Predicated region
      $region21: #{tpu_custom_call.1} parent=5 // pred_check
        %p150 = pneg %p149
      $region22: #{tpu_custom_call.1} parent=5 // pred_check_branch
        %152 = sbr.rel (%p150) target = $region24
      $region23: #{tpu_custom_call.1} parent=5 // pred_region
        // Predicated region
        $region25: #{tpu_custom_call.1} parent=23 // pred_check
          %p153 = pneg %p36
        $region26: #{tpu_custom_call.1} parent=23 // pred_check_branch
          %155 = sbr.rel (%p153) target = $region28
        $region27: #{tpu_custom_call.1} parent=23 // pred_region
          %s156 = sand.u32 %s26, 1
          %s157 = scalar_lea.sflag [#allocation3], %s156
          %s158 = sand.u32 %s26, 1
          %s159 = smul.addr %s158, 256
          %s160 = scalar_lea.vmem [#allocation2], %s159
          %s161 = smul.u32 32, %s16
          %s163 = ssub.s32 4096, 4096
          %164 = vsyncadd %s157, %s163
          %s165 = smul.addr %s161, 128
          %s166 = scalar_lea.hbm %s0, %s165
          %s167 = sshll.u32 %s160, 4
          %s168 = int_to_ptr.vmem [resolvable:$true] %s167
          %173 = dma.hbm_to_vmem [thread:$0]  %s166, 4096, %s168, %s157, 128, 128, 8
        $region28: #{tpu_custom_call.1} parent=23 // pred_fallthru
          _
      $region24: #{tpu_custom_call.1} parent=5 // pred_fallthru
        _
      %p174 = scmp.le.s32.totalorder 1, %s16
      %p175 = scmp.lt.s32.totalorder %s16, 3
      %p176 = pnand %p174, %p175
      %p177 = pneg %p176
      // Predicated region
      $region29: #{tpu_custom_call.1} parent=5 // pred_check
        _
      $region30: #{tpu_custom_call.1} parent=5 // pred_check_branch
        %179 = sbr.rel (%p176) target = $region32
      $region31: #{tpu_custom_call.1} parent=5 // pred_region
        %s180 = ssub.s32 %s16, 1
        %s181 = sand.u32 %s29, 1
        %s182 = scalar_lea.sflag [#allocation3], %s181
        %s183 = sand.u32 %s29, 1
        %s184 = smul.addr %s183, 256
        %s185 = scalar_lea.vmem [#allocation2], %s184
        // Predicated region
        $region33: #{tpu_custom_call.1} parent=31 // pred_check
          %p186 = pneg %p42
        $region34: #{tpu_custom_call.1} parent=31 // pred_check_branch
          %188 = sbr.rel (%p186) target = $region36
        $region35: #{tpu_custom_call.1} parent=31 // pred_region
          %189 = dma.done %s182, 4096
        $region36: #{tpu_custom_call.1} parent=31 // pred_fallthru
          _
        // Predicated region
        $region37: #{tpu_custom_call.1} parent=31 // pred_check
          %p190 = pneg %p63
        $region38: #{tpu_custom_call.1} parent=31 // pred_check_branch
          %192 = sbr.rel (%p190) target = $region40
        $region39: #{tpu_custom_call.1} parent=31 // pred_region
          %193 = dma.done [#allocation6], 12288
        $region40: #{tpu_custom_call.1} parent=31 // pred_fallthru
          _
        // Predicated region
        $region41: #{tpu_custom_call.1} parent=31 // pred_check
          %p194 = pneg %p84
        $region42: #{tpu_custom_call.1} parent=31 // pred_check_branch
          %196 = sbr.rel (%p194) target = $region44
        $region43: #{tpu_custom_call.1} parent=31 // pred_region
          %197 = dma.done [#allocation6], 128
        $region44: #{tpu_custom_call.1} parent=31 // pred_fallthru
          _
        %s198 = sand.u32 %s29, 1
        %s199 = scalar_lea.sflag [#allocation3], %s198
        %s200 = sand.u32 %s29, 1
        %s201 = smul.addr %s200, 256
        %s202 = scalar_lea.vmem [#allocation2], %s201
        %p203 = pneg %p42
        %p204 = pneg %p39
        %p205 = pneg %p63
        %p206 = pneg %p60
        %p207 = pneg %p84
        %p208 = pneg %p81
        %p209 = pneg %p110
        %p210 = pneg %p107
        %s211 = sand.u32 %s97, 1
        %s212 = scalar_lea.sflag [#allocation4], %s211
        %s213 = sand.u32 %s97, 1
        %s214 = smul.addr %s213, 256
        %s215 = scalar_lea.vmem [#allocation8], %s214
        %s216 = smul.u32 32, %s21
        %s217 = smul.u32 32, %s21
        %v218 = vld [vmem:[#allocation7] sm:$0x3f]
        %v219 = vld [vmem:[%s185] sm:$0xff]
        %v220 = vld [vmem:[%s185 + $0x8] sm:$0xff]
        %v221 = vld [vmem:[%s185 + $0x10] sm:$0xff]
        %v222 = vld [vmem:[%s185 + $0x18] sm:$0xff]
        %v223 = vld [vmem:[%s185 + $0x20] sm:$0xff]
        %v224 = vld [vmem:[%s185 + $0x28] sm:$0xff]
        %v225 = vld [vmem:[%s185 + $0x30] sm:$0xff]
        %v226 = vld [vmem:[%s185 + $0x38] sm:$0xff]
        %v227 = vld [vmem:[%s185 + $0x40] sm:$0xff]
        %v228 = vld [vmem:[%s185 + $0x48] sm:$0xff]
        %v229 = vld [vmem:[%s185 + $0x50] sm:$0xff]
        %v230 = vld [vmem:[%s185 + $0x58] sm:$0xff]
        %v231 = vld [vmem:[%s185 + $0x60] sm:$0xff]
        %v232 = vld [vmem:[%s185 + $0x68] sm:$0xff]
        %v233 = vld [vmem:[%s185 + $0x70] sm:$0xff]
        %v234 = vld [vmem:[%s185 + $0x78] sm:$0xff]
        %v235 = vld [vmem:[%s185 + $0x80] sm:$0xff]
        %v236 = vld [vmem:[%s185 + $0x88] sm:$0xff]
        %v237 = vld [vmem:[%s185 + $0x90] sm:$0xff]
        %v238 = vld [vmem:[%s185 + $0x98] sm:$0xff]
        %v239 = vld [vmem:[%s185 + $0xa0] sm:$0xff]
        %v240 = vld [vmem:[%s185 + $0xa8] sm:$0xff]
        %v241 = vld [vmem:[%s185 + $0xb0] sm:$0xff]
        %v242 = vld [vmem:[%s185 + $0xb8] sm:$0xff]
        %v243 = vld [vmem:[%s185 + $0xc0] sm:$0xff]
        %v244 = vld [vmem:[%s185 + $0xc8] sm:$0xff]
        %v245 = vld [vmem:[%s185 + $0xd0] sm:$0xff]
        %v246 = vld [vmem:[%s185 + $0xd8] sm:$0xff]
        %v247 = vld [vmem:[%s185 + $0xe0] sm:$0xff]
        %v248 = vld [vmem:[%s185 + $0xe8] sm:$0xff]
        %v249 = vld [vmem:[%s185 + $0xf0] sm:$0xff]
        %v250 = vld [vmem:[%s185 + $0xf8] sm:$0xff]
        %v251 = vld [vmem:[#allocation5] sm:$0xff]
        %v252 = vld [vmem:[#allocation5 + $0x8] sm:$0xff]
        %v253 = vld [vmem:[#allocation5 + $0x10] sm:$0xff]
        %v254 = vld [vmem:[#allocation5 + $0x18] sm:$0xff]
        %v255 = vld [vmem:[#allocation5 + $0x20] sm:$0xff]
        %v256 = vld [vmem:[#allocation5 + $0x28] sm:$0xff]
        %v257 = vld [vmem:[#allocation5 + $0x30] sm:$0xff]
        %v258 = vld [vmem:[#allocation5 + $0x38] sm:$0xff]
        %v259 = vld [vmem:[#allocation5 + $0x40] sm:$0xff]
        %v260 = vld [vmem:[#allocation5 + $0x48] sm:$0xff]
        %v261 = vld [vmem:[#allocation5 + $0x50] sm:$0xff]
        %v262 = vld [vmem:[#allocation5 + $0x58] sm:$0xff]
        %v263 = vld [vmem:[#allocation5 + $0x60] sm:$0xff]
        %v264 = vld [vmem:[#allocation5 + $0x68] sm:$0xff]
        %v265 = vld [vmem:[#allocation5 + $0x70] sm:$0xff]
        %v266 = vld [vmem:[#allocation5 + $0x78] sm:$0xff]
        %v267 = vlaneseq
        %v268 = vshrl.u32 %v267, 7
        %v269 = vsub.s32 0, %v268
        %v270 = vrot.slane %v218, %v269
        %271 = vmatprep.subr.mxu0 0.0
        %272 = vmatpush1.msra.mxu0 %v251
        %273 = vmatprep.subr.mxu0 0.0
        %274 = vmatpush1.msra.mxu0 %v252
        %275 = vmatprep.subr.mxu0 0.0
        %276 = vmatpush1.msra.mxu0 %v253
        %277 = vmatprep.subr.mxu0 0.0
        %278 = vmatpush1.msra.mxu0 %v254
        %279 = vmatprep.subr.mxu0 0.0
        %280 = vmatpush1.msra.mxu0 %v255
        %281 = vmatprep.subr.mxu0 0.0
        %282 = vmatpush1.msra.mxu0 %v256
        %283 = vmatprep.subr.mxu0 0.0
        %284 = vmatpush1.msra.mxu0 %v257
        %285 = vmatprep.subr.mxu0 0.0
        %286 = vmatpush1.msra.mxu0 %v258
        %287 = vmatprep.subr.mxu0 0.0
        %288 = vmatpush1.msra.mxu0 %v259
        %289 = vmatprep.subr.mxu0 0.0
        %290 = vmatpush1.msra.mxu0 %v260
        %291 = vmatprep.subr.mxu0 0.0
        %292 = vmatpush1.msra.mxu0 %v261
        %293 = vmatprep.subr.mxu0 0.0
        %294 = vmatpush1.msra.mxu0 %v262
        %295 = vmatprep.subr.mxu0 0.0
        %296 = vmatpush1.msra.mxu0 %v263
        %297 = vmatprep.subr.mxu0 0.0
        %298 = vmatpush1.msra.mxu0 %v264
        %299 = vmatprep.subr.mxu0 0.0
        %300 = vmatpush1.msra.mxu0 %v265
        %301 = vmatprep.subr.mxu0 0.0
        %302 = vmatpush1.msra.mxu0 %v266
        %303 = vmatprep.subr.mxu0 0.0
        %304 = vmatpush1.msra.mxu0 0.0
        %305 = vmatprep.subr.mxu0 0.0
        %306 = vmatpush1.msra.mxu0 0.0
        %307 = vmatprep.subr.mxu0 0.0
        %308 = vmatpush1.msra.mxu0 0.0
        %309 = vmatprep.subr.mxu0 0.0
        %310 = vmatpush1.msra.mxu0 0.0
        %311 = vmatprep.subr.mxu0 0.0
        %312 = vmatpush1.msra.mxu0 0.0
        %313 = vmatprep.subr.mxu0 0.0
        %314 = vmatpush1.msra.mxu0 0.0
        %315 = vmatprep.subr.mxu0 0.0
        %316 = vmatpush1.msra.mxu0 0.0
        %317 = vmatprep.subr.mxu0 0.0
        %318 = vmatpush1.msra.mxu0 0.0
        %319 = vmatprep.subr.mxu0 0.0
        %320 = vmatpush1.msra.mxu0 0.0
        %321 = vmatprep.subr.mxu0 0.0
        %322 = vmatpush1.msra.mxu0 0.0
        %323 = vmatprep.subr.mxu0 0.0
        %324 = vmatpush1.msra.mxu0 0.0
        %325 = vmatprep.subr.mxu0 0.0
        %326 = vmatpush1.msra.mxu0 0.0
        %327 = vmatprep.subr.mxu0 0.0
        %328 = vmatpush1.msra.mxu0 0.0
        %329 = vmatprep.subr.mxu0 0.0
        %330 = vmatpush1.msra.mxu0 0.0
        %331 = vmatprep.subr.mxu0 0.0
        %332 = vmatpush1.msra.mxu0 0.0
        %333 = vmatprep.subr.mxu0 0.0
        %334 = vmatpush1.msra.mxu0 0.0
        %335 = vmatprep.mubr.f32.mxu0 0.0
        %336 = vmatmul.mubr.f32.gmra.mrb[0].mxu0 %v219
        %v337 = vpop.f32.mrb[0].mxu0
        %v338 = vadd.f32 %v270, %v337
        %v339 = vpop.f32.mrb[0].mxu0
        %340 = vmatprep.mubr.f32.mxu0 0.0
        %341 = vmatmul.mubr.f32.gmra.mrb[0].mxu0 %v220
        %v342 = vpop.f32.mrb[0].mxu0
        %v343 = vadd.f32 %v270, %v342
        %v344 = vpop.f32.mrb[0].mxu0
        %345 = vmatprep.mubr.f32.mxu0 0.0
        %346 = vmatmul.mubr.f32.gmra.mrb[0].mxu0 %v221
        %v347 = vpop.f32.mrb[0].mxu0
        %v348 = vadd.f32 %v270, %v347
        %v349 = vpop.f32.mrb[0].mxu0
        %350 = vmatprep.mubr.f32.mxu0 0.0
        %351 = vmatmul.mubr.f32.gmra.mrb[0].mxu0 %v222
        %v352 = vpop.f32.mrb[0].mxu0
        %v353 = vadd.f32 %v270, %v352
        %v354 = vpop.f32.mrb[0].mxu0
        %355 = vmatprep.mubr.f32.mxu0 0.0
        %356 = vmatmul.mubr.f32.gmra.mrb[0].mxu0 %v223
        %v357 = vpop.f32.mrb[0].mxu0
        %v358 = vadd.f32 %v270, %v357
        %v359 = vpop.f32.mrb[0].mxu0
        %360 = vmatprep.mubr.f32.mxu0 0.0
        %361 = vmatmul.mubr.f32.gmra.mrb[0].mxu0 %v224
        %v362 = vpop.f32.mrb[0].mxu0
        %v363 = vadd.f32 %v270, %v362
        %v364 = vpop.f32.mrb[0].mxu0
        %365 = vmatprep.mubr.f32.mxu0 0.0
        %366 = vmatmul.mubr.f32.gmra.mrb[0].mxu0 %v225
        %v367 = vpop.f32.mrb[0].mxu0
        %v368 = vadd.f32 %v270, %v367
        %v369 = vpop.f32.mrb[0].mxu0
        %370 = vmatprep.mubr.f32.mxu0 0.0
        %371 = vmatmul.mubr.f32.gmra.mrb[0].mxu0 %v226
        %v372 = vpop.f32.mrb[0].mxu0
        %v373 = vadd.f32 %v270, %v372
        %v374 = vpop.f32.mrb[0].mxu0
        %375 = vmatprep.mubr.f32.mxu0 0.0
        %376 = vmatmul.mubr.f32.gmra.mrb[0].mxu0 %v227
        %v377 = vpop.f32.mrb[0].mxu0
        %v378 = vadd.f32 %v270, %v377
        %v379 = vpop.f32.mrb[0].mxu0
        %380 = vmatprep.mubr.f32.mxu0 0.0
        %381 = vmatmul.mubr.f32.gmra.mrb[0].mxu0 %v228
        %v382 = vpop.f32.mrb[0].mxu0
        %v383 = vadd.f32 %v270, %v382
        %v384 = vpop.f32.mrb[0].mxu0
        %385 = vmatprep.mubr.f32.mxu0 0.0
        %386 = vmatmul.mubr.f32.gmra.mrb[0].mxu0 %v229
        %v387 = vpop.f32.mrb[0].mxu0
        %v388 = vadd.f32 %v270, %v387
        %v389 = vpop.f32.mrb[0].mxu0
        %390 = vmatprep.mubr.f32.mxu0 0.0
        %391 = vmatmul.mubr.f32.gmra.mrb[0].mxu0 %v230
        %v392 = vpop.f32.mrb[0].mxu0
        %v393 = vadd.f32 %v270, %v392
        %v394 = vpop.f32.mrb[0].mxu0
        %395 = vmatprep.mubr.f32.mxu0 0.0
        %396 = vmatmul.mubr.f32.gmra.mrb[0].mxu0 %v231
        %v397 = vpop.f32.mrb[0].mxu0
        %v398 = vadd.f32 %v270, %v397
        %v399 = vpop.f32.mrb[0].mxu0
        %400 = vmatprep.mubr.f32.mxu0 0.0
        %401 = vmatmul.mubr.f32.gmra.mrb[0].mxu0 %v232
        %v402 = vpop.f32.mrb[0].mxu0
        %v403 = vadd.f32 %v270, %v402
        %v404 = vpop.f32.mrb[0].mxu0
        %405 = vmatprep.mubr.f32.mxu0 0.0
        %406 = vmatmul.mubr.f32.gmra.mrb[0].mxu0 %v233
        %v407 = vpop.f32.mrb[0].mxu0
        %v408 = vadd.f32 %v270, %v407
        %v409 = vpop.f32.mrb[0].mxu0
        %410 = vmatprep.mubr.f32.mxu0 0.0
        %411 = vmatmul.mubr.f32.gmra.mrb[0].mxu0 %v234
        %v412 = vpop.f32.mrb[0].mxu0
        %v413 = vadd.f32 %v270, %v412
        %v414 = vpop.f32.mrb[0].mxu0
        %415 = vmatprep.mubr.f32.mxu0 0.0
        %416 = vmatmul.mubr.f32.gmra.mrb[0].mxu0 %v235
        %v417 = vpop.f32.mrb[0].mxu0
        %v418 = vadd.f32 %v270, %v417
        %v419 = vpop.f32.mrb[0].mxu0
        %420 = vmatprep.mubr.f32.mxu0 0.0
        %421 = vmatmul.mubr.f32.gmra.mrb[0].mxu0 %v236
        %v422 = vpop.f32.mrb[0].mxu0
        %v423 = vadd.f32 %v270, %v422
        %v424 = vpop.f32.mrb[0].mxu0
        %425 = vmatprep.mubr.f32.mxu0 0.0
        %426 = vmatmul.mubr.f32.gmra.mrb[0].mxu0 %v237
        %v427 = vpop.f32.mrb[0].mxu0
        %v428 = vadd.f32 %v270, %v427
        %v429 = vpop.f32.mrb[0].mxu0
        %430 = vmatprep.mubr.f32.mxu0 0.0
        %431 = vmatmul.mubr.f32.gmra.mrb[0].mxu0 %v238
        %v432 = vpop.f32.mrb[0].mxu0
        %v433 = vadd.f32 %v270, %v432
        %v434 = vpop.f32.mrb[0].mxu0
        %435 = vmatprep.mubr.f32.mxu0 0.0
        %436 = vmatmul.mubr.f32.gmra.mrb[0].mxu0 %v239
        %v437 = vpop.f32.mrb[0].mxu0
        %v438 = vadd.f32 %v270, %v437
        %v439 = vpop.f32.mrb[0].mxu0
        %440 = vmatprep.mubr.f32.mxu0 0.0
        %441 = vmatmul.mubr.f32.gmra.mrb[0].mxu0 %v240
        %v442 = vpop.f32.mrb[0].mxu0
        %v443 = vadd.f32 %v270, %v442
        %v444 = vpop.f32.mrb[0].mxu0
        %445 = vmatprep.mubr.f32.mxu0 0.0
        %446 = vmatmul.mubr.f32.gmra.mrb[0].mxu0 %v241
        %v447 = vpop.f32.mrb[0].mxu0
        %v448 = vadd.f32 %v270, %v447
        %v449 = vpop.f32.mrb[0].mxu0
        %450 = vmatprep.mubr.f32.mxu0 0.0
        %451 = vmatmul.mubr.f32.gmra.mrb[0].mxu0 %v242
        %v452 = vpop.f32.mrb[0].mxu0
        %v453 = vadd.f32 %v270, %v452
        %v454 = vpop.f32.mrb[0].mxu0
        %455 = vmatprep.mubr.f32.mxu0 0.0
        %456 = vmatmul.mubr.f32.gmra.mrb[0].mxu0 %v243
        %v457 = vpop.f32.mrb[0].mxu0
        %v458 = vadd.f32 %v270, %v457
        %v459 = vpop.f32.mrb[0].mxu0
        %460 = vmatprep.mubr.f32.mxu0 0.0
        %461 = vmatmul.mubr.f32.gmra.mrb[0].mxu0 %v244
        %v462 = vpop.f32.mrb[0].mxu0
        %v463 = vadd.f32 %v270, %v462
        %v464 = vpop.f32.mrb[0].mxu0
        %465 = vmatprep.mubr.f32.mxu0 0.0
        %466 = vmatmul.mubr.f32.gmra.mrb[0].mxu0 %v245
        %v467 = vpop.f32.mrb[0].mxu0
        %v468 = vadd.f32 %v270, %v467
        %v469 = vpop.f32.mrb[0].mxu0
        %470 = vmatprep.mubr.f32.mxu0 0.0
        %471 = vmatmul.mubr.f32.gmra.mrb[0].mxu0 %v246
        %v472 = vpop.f32.mrb[0].mxu0
        %v473 = vadd.f32 %v270, %v472
        %v474 = vpop.f32.mrb[0].mxu0
        %475 = vmatprep.mubr.f32.mxu0 0.0
        %476 = vmatmul.mubr.f32.gmra.mrb[0].mxu0 %v247
        %v477 = vpop.f32.mrb[0].mxu0
        %v478 = vadd.f32 %v270, %v477
        %v479 = vpop.f32.mrb[0].mxu0
        %480 = vmatprep.mubr.f32.mxu0 0.0
        %481 = vmatmul.mubr.f32.gmra.mrb[0].mxu0 %v248
        %v482 = vpop.f32.mrb[0].mxu0
        %v483 = vadd.f32 %v270, %v482
        %v484 = vpop.f32.mrb[0].mxu0
        %485 = vmatprep.mubr.f32.mxu0 0.0
        %486 = vmatmul.mubr.f32.gmra.mrb[0].mxu0 %v249
        %v487 = vpop.f32.mrb[0].mxu0
        %v488 = vadd.f32 %v270, %v487
        %v489 = vpop.f32.mrb[0].mxu0
        %490 = vmatprep.mubr.f32.mxu0 0.0
        %491 = vmatmul.mubr.f32.gmra.mrb[0].mxu0 %v250
        %v492 = vpop.f32.mrb[0].mxu0
        %v493 = vadd.f32 %v270, %v492
        %v494 = vpop.f32.mrb[0].mxu0
        %495 = vdwg.mxu0
        %v496 = vmax.f32 %v338, 0.0
        %v497 = vmax.f32 %v343, 0.0
        %v498 = vmax.f32 %v348, 0.0
        %v499 = vmax.f32 %v353, 0.0
        %v500 = vmax.f32 %v358, 0.0
        %v501 = vmax.f32 %v363, 0.0
        %v502 = vmax.f32 %v368, 0.0
        %v503 = vmax.f32 %v373, 0.0
        %v504 = vmax.f32 %v378, 0.0
        %v505 = vmax.f32 %v383, 0.0
        %v506 = vmax.f32 %v388, 0.0
        %v507 = vmax.f32 %v393, 0.0
        %v508 = vmax.f32 %v398, 0.0
        %v509 = vmax.f32 %v403, 0.0
        %v510 = vmax.f32 %v408, 0.0
        %v511 = vmax.f32 %v413, 0.0
        %v512 = vmax.f32 %v418, 0.0
        %v513 = vmax.f32 %v423, 0.0
        %v514 = vmax.f32 %v428, 0.0
        %v515 = vmax.f32 %v433, 0.0
        %v516 = vmax.f32 %v438, 0.0
        %v517 = vmax.f32 %v443, 0.0
        %v518 = vmax.f32 %v448, 0.0
        %v519 = vmax.f32 %v453, 0.0
        %v520 = vmax.f32 %v458, 0.0
        %v521 = vmax.f32 %v463, 0.0
        %v522 = vmax.f32 %v468, 0.0
        %v523 = vmax.f32 %v473, 0.0
        %v524 = vmax.f32 %v478, 0.0
        %v525 = vmax.f32 %v483, 0.0
        %v526 = vmax.f32 %v488, 0.0
        %v527 = vmax.f32 %v493, 0.0
        %s528 = scalar_lea.vmem [#allocation5], 128
        %v529 = vld [vmem:[%s528] sm:$0xff]
        %v530 = vld [vmem:[%s528 + $0x8] sm:$0xff]
        %v531 = vld [vmem:[%s528 + $0x10] sm:$0xff]
        %v532 = vld [vmem:[%s528 + $0x18] sm:$0xff]
        %v533 = vld [vmem:[%s528 + $0x20] sm:$0xff]
        %v534 = vld [vmem:[%s528 + $0x28] sm:$0xff]
        %v535 = vld [vmem:[%s528 + $0x30] sm:$0xff]
        %v536 = vld [vmem:[%s528 + $0x38] sm:$0xff]
        %v537 = vld [vmem:[%s528 + $0x40] sm:$0xff]
        %v538 = vld [vmem:[%s528 + $0x48] sm:$0xff]
        %v539 = vld [vmem:[%s528 + $0x50] sm:$0xff]
        %v540 = vld [vmem:[%s528 + $0x58] sm:$0xff]
        %v541 = vld [vmem:[%s528 + $0x60] sm:$0xff]
        %v542 = vld [vmem:[%s528 + $0x68] sm:$0xff]
        %v543 = vld [vmem:[%s528 + $0x70] sm:$0xff]
        %v544 = vld [vmem:[%s528 + $0x78] sm:$0xff]
        %v545 = vlaneseq
        %v546 = vshrl.u32 %v545, 7
        %v547 = vsub.s32 1, %v546
        %v548 = vrot.slane %v218, %v547
        %549 = vmatprep.subr.mxu0 0.0
        %550 = vmatpush1.msra.mxu0 %v529
        %551 = vmatprep.subr.mxu0 0.0
        %552 = vmatpush1.msra.mxu0 %v530
        %553 = vmatprep.subr.mxu0 0.0
        %554 = vmatpush1.msra.mxu0 %v531
        %555 = vmatprep.subr.mxu0 0.0
        %556 = vmatpush1.msra.mxu0 %v532
        %557 = vmatprep.subr.mxu0 0.0
        %558 = vmatpush1.msra.mxu0 %v533
        %559 = vmatprep.subr.mxu0 0.0
        %560 = vmatpush1.msra.mxu0 %v534
        %561 = vmatprep.subr.mxu0 0.0
        %562 = vmatpush1.msra.mxu0 %v535
        %563 = vmatprep.subr.mxu0 0.0
        %564 = vmatpush1.msra.mxu0 %v536
        %565 = vmatprep.subr.mxu0 0.0
        %566 = vmatpush1.msra.mxu0 %v537
        %567 = vmatprep.subr.mxu0 0.0
        %568 = vmatpush1.msra.mxu0 %v538
        %569 = vmatprep.subr.mxu0 0.0
        %570 = vmatpush1.msra.mxu0 %v539
        %571 = vmatprep.subr.mxu0 0.0
        %572 = vmatpush1.msra.mxu0 %v540
        %573 = vmatprep.subr.mxu0 0.0
        %574 = vmatpush1.msra.mxu0 %v541
        %575 = vmatprep.subr.mxu0 0.0
        %576 = vmatpush1.msra.mxu0 %v542
        %577 = vmatprep.subr.mxu0 0.0
        %578 = vmatpush1.msra.mxu0 %v543
        %579 = vmatprep.subr.mxu0 0.0
        %580 = vmatpush1.msra.mxu0 %v544
        %581 = vmatprep.subr.mxu0 0.0
        %582 = vmatpush1.msra.mxu0 0.0
        %583 = vmatprep.subr.mxu0 0.0
        %584 = vmatpush1.msra.mxu0 0.0
        %585 = vmatprep.subr.mxu0 0.0
        %586 = vmatpush1.msra.mxu0 0.0
        %587 = vmatprep.subr.mxu0 0.0
        %588 = vmatpush1.msra.mxu0 0.0
        %589 = vmatprep.subr.mxu0 0.0
        %590 = vmatpush1.msra.mxu0 0.0
        %591 = vmatprep.subr.mxu0 0.0
        %592 = vmatpush1.msra.mxu0 0.0
        %593 = vmatprep.subr.mxu0 0.0
        %594 = vmatpush1.msra.mxu0 0.0
        %595 = vmatprep.subr.mxu0 0.0
        %596 = vmatpush1.msra.mxu0 0.0
        %597 = vmatprep.subr.mxu0 0.0
        %598 = vmatpush1.msra.mxu0 0.0
        %599 = vmatprep.subr.mxu0 0.0
        %600 = vmatpush1.msra.mxu0 0.0
        %601 = vmatprep.subr.mxu0 0.0
        %602 = vmatpush1.msra.mxu0 0.0
        %603 = vmatprep.subr.mxu0 0.0
        %604 = vmatpush1.msra.mxu0 0.0
        %605 = vmatprep.subr.mxu0 0.0
        %606 = vmatpush1.msra.mxu0 0.0
        %607 = vmatprep.subr.mxu0 0.0
        %608 = vmatpush1.msra.mxu0 0.0
        %609 = vmatprep.subr.mxu0 0.0
        %610 = vmatpush1.msra.mxu0 0.0
        %611 = vmatprep.subr.mxu0 0.0
        %612 = vmatpush1.msra.mxu0 0.0
        %613 = vmatprep.mubr.f32.mxu0 0.0
        %614 = vmatmul.mubr.f32.gmra.mrb[0].mxu0 %v496
        %v615 = vpop.f32.mrb[0].mxu0
        %v616 = vadd.f32 %v548, %v615
        %v617 = vpop.f32.mrb[0].mxu0
        %618 = vmatprep.mubr.f32.mxu0 0.0
        %619 = vmatmul.mubr.f32.gmra.mrb[0].mxu0 %v497
        %v620 = vpop.f32.mrb[0].mxu0
        %v621 = vadd.f32 %v548, %v620
        %v622 = vpop.f32.mrb[0].mxu0
        %623 = vmatprep.mubr.f32.mxu0 0.0
        %624 = vmatmul.mubr.f32.gmra.mrb[0].mxu0 %v498
        %v625 = vpop.f32.mrb[0].mxu0
        %v626 = vadd.f32 %v548, %v625
        %v627 = vpop.f32.mrb[0].mxu0
        %628 = vmatprep.mubr.f32.mxu0 0.0
        %629 = vmatmul.mubr.f32.gmra.mrb[0].mxu0 %v499
        %v630 = vpop.f32.mrb[0].mxu0
        %v631 = vadd.f32 %v548, %v630
        %v632 = vpop.f32.mrb[0].mxu0
        %633 = vmatprep.mubr.f32.mxu0 0.0
        %634 = vmatmul.mubr.f32.gmra.mrb[0].mxu0 %v500
        %v635 = vpop.f32.mrb[0].mxu0
        %v636 = vadd.f32 %v548, %v635
        %v637 = vpop.f32.mrb[0].mxu0
        %638 = vmatprep.mubr.f32.mxu0 0.0
        %639 = vmatmul.mubr.f32.gmra.mrb[0].mxu0 %v501
        %v640 = vpop.f32.mrb[0].mxu0
        %v641 = vadd.f32 %v548, %v640
        %v642 = vpop.f32.mrb[0].mxu0
        %643 = vmatprep.mubr.f32.mxu0 0.0
        %644 = vmatmul.mubr.f32.gmra.mrb[0].mxu0 %v502
        %v645 = vpop.f32.mrb[0].mxu0
        %v646 = vadd.f32 %v548, %v645
        %v647 = vpop.f32.mrb[0].mxu0
        %648 = vmatprep.mubr.f32.mxu0 0.0
        %649 = vmatmul.mubr.f32.gmra.mrb[0].mxu0 %v503
        %v650 = vpop.f32.mrb[0].mxu0
        %v651 = vadd.f32 %v548, %v650
        %v652 = vpop.f32.mrb[0].mxu0
        %653 = vmatprep.mubr.f32.mxu0 0.0
        %654 = vmatmul.mubr.f32.gmra.mrb[0].mxu0 %v504
        %v655 = vpop.f32.mrb[0].mxu0
        %v656 = vadd.f32 %v548, %v655
        %v657 = vpop.f32.mrb[0].mxu0
        %658 = vmatprep.mubr.f32.mxu0 0.0
        %659 = vmatmul.mubr.f32.gmra.mrb[0].mxu0 %v505
        %v660 = vpop.f32.mrb[0].mxu0
        %v661 = vadd.f32 %v548, %v660
        %v662 = vpop.f32.mrb[0].mxu0
        %663 = vmatprep.mubr.f32.mxu0 0.0
        %664 = vmatmul.mubr.f32.gmra.mrb[0].mxu0 %v506
        %v665 = vpop.f32.mrb[0].mxu0
        %v666 = vadd.f32 %v548, %v665
        %v667 = vpop.f32.mrb[0].mxu0
        %668 = vmatprep.mubr.f32.mxu0 0.0
        %669 = vmatmul.mubr.f32.gmra.mrb[0].mxu0 %v507
        %v670 = vpop.f32.mrb[0].mxu0
        %v671 = vadd.f32 %v548, %v670
        %v672 = vpop.f32.mrb[0].mxu0
        %673 = vmatprep.mubr.f32.mxu0 0.0
        %674 = vmatmul.mubr.f32.gmra.mrb[0].mxu0 %v508
        %v675 = vpop.f32.mrb[0].mxu0
        %v676 = vadd.f32 %v548, %v675
        %v677 = vpop.f32.mrb[0].mxu0
        %678 = vmatprep.mubr.f32.mxu0 0.0
        %679 = vmatmul.mubr.f32.gmra.mrb[0].mxu0 %v509
        %v680 = vpop.f32.mrb[0].mxu0
        %v681 = vadd.f32 %v548, %v680
        %v682 = vpop.f32.mrb[0].mxu0
        %683 = vmatprep.mubr.f32.mxu0 0.0
        %684 = vmatmul.mubr.f32.gmra.mrb[0].mxu0 %v510
        %v685 = vpop.f32.mrb[0].mxu0
        %v686 = vadd.f32 %v548, %v685
        %v687 = vpop.f32.mrb[0].mxu0
        %688 = vmatprep.mubr.f32.mxu0 0.0
        %689 = vmatmul.mubr.f32.gmra.mrb[0].mxu0 %v511
        %v690 = vpop.f32.mrb[0].mxu0
        %v691 = vadd.f32 %v548, %v690
        %v692 = vpop.f32.mrb[0].mxu0
        %693 = vmatprep.mubr.f32.mxu0 0.0
        %694 = vmatmul.mubr.f32.gmra.mrb[0].mxu0 %v512
        %v695 = vpop.f32.mrb[0].mxu0
        %v696 = vadd.f32 %v548, %v695
        %v697 = vpop.f32.mrb[0].mxu0
        %698 = vmatprep.mubr.f32.mxu0 0.0
        %699 = vmatmul.mubr.f32.gmra.mrb[0].mxu0 %v513
        %v700 = vpop.f32.mrb[0].mxu0
        %v701 = vadd.f32 %v548, %v700
        %v702 = vpop.f32.mrb[0].mxu0
        %703 = vmatprep.mubr.f32.mxu0 0.0
        %704 = vmatmul.mubr.f32.gmra.mrb[0].mxu0 %v514
        %v705 = vpop.f32.mrb[0].mxu0
        %v706 = vadd.f32 %v548, %v705
        %v707 = vpop.f32.mrb[0].mxu0
        %708 = vmatprep.mubr.f32.mxu0 0.0
        %709 = vmatmul.mubr.f32.gmra.mrb[0].mxu0 %v515
        %v710 = vpop.f32.mrb[0].mxu0
        %v711 = vadd.f32 %v548, %v710
        %v712 = vpop.f32.mrb[0].mxu0
        %713 = vmatprep.mubr.f32.mxu0 0.0
        %714 = vmatmul.mubr.f32.gmra.mrb[0].mxu0 %v516
        %v715 = vpop.f32.mrb[0].mxu0
        %v716 = vadd.f32 %v548, %v715
        %v717 = vpop.f32.mrb[0].mxu0
        %718 = vmatprep.mubr.f32.mxu0 0.0
        %719 = vmatmul.mubr.f32.gmra.mrb[0].mxu0 %v517
        %v720 = vpop.f32.mrb[0].mxu0
        %v721 = vadd.f32 %v548, %v720
        %v722 = vpop.f32.mrb[0].mxu0
        %723 = vmatprep.mubr.f32.mxu0 0.0
        %724 = vmatmul.mubr.f32.gmra.mrb[0].mxu0 %v518
        %v725 = vpop.f32.mrb[0].mxu0
        %v726 = vadd.f32 %v548, %v725
        %v727 = vpop.f32.mrb[0].mxu0
        %728 = vmatprep.mubr.f32.mxu0 0.0
        %729 = vmatmul.mubr.f32.gmra.mrb[0].mxu0 %v519
        %v730 = vpop.f32.mrb[0].mxu0
        %v731 = vadd.f32 %v548, %v730
        %v732 = vpop.f32.mrb[0].mxu0
        %733 = vmatprep.mubr.f32.mxu0 0.0
        %734 = vmatmul.mubr.f32.gmra.mrb[0].mxu0 %v520
        %v735 = vpop.f32.mrb[0].mxu0
        %v736 = vadd.f32 %v548, %v735
        %v737 = vpop.f32.mrb[0].mxu0
        %738 = vmatprep.mubr.f32.mxu0 0.0
        %739 = vmatmul.mubr.f32.gmra.mrb[0].mxu0 %v521
        %v740 = vpop.f32.mrb[0].mxu0
        %v741 = vadd.f32 %v548, %v740
        %v742 = vpop.f32.mrb[0].mxu0
        %743 = vmatprep.mubr.f32.mxu0 0.0
        %744 = vmatmul.mubr.f32.gmra.mrb[0].mxu0 %v522
        %v745 = vpop.f32.mrb[0].mxu0
        %v746 = vadd.f32 %v548, %v745
        %v747 = vpop.f32.mrb[0].mxu0
        %748 = vmatprep.mubr.f32.mxu0 0.0
        %749 = vmatmul.mubr.f32.gmra.mrb[0].mxu0 %v523
        %v750 = vpop.f32.mrb[0].mxu0
        %v751 = vadd.f32 %v548, %v750
        %v752 = vpop.f32.mrb[0].mxu0
        %753 = vmatprep.mubr.f32.mxu0 0.0
        %754 = vmatmul.mubr.f32.gmra.mrb[0].mxu0 %v524
        %v755 = vpop.f32.mrb[0].mxu0
        %v756 = vadd.f32 %v548, %v755
        %v757 = vpop.f32.mrb[0].mxu0
        %758 = vmatprep.mubr.f32.mxu0 0.0
        %759 = vmatmul.mubr.f32.gmra.mrb[0].mxu0 %v525
        %v760 = vpop.f32.mrb[0].mxu0
        %v761 = vadd.f32 %v548, %v760
        %v762 = vpop.f32.mrb[0].mxu0
        %763 = vmatprep.mubr.f32.mxu0 0.0
        %764 = vmatmul.mubr.f32.gmra.mrb[0].mxu0 %v526
        %v765 = vpop.f32.mrb[0].mxu0
        %v766 = vadd.f32 %v548, %v765
        %v767 = vpop.f32.mrb[0].mxu0
        %768 = vmatprep.mubr.f32.mxu0 0.0
        %769 = vmatmul.mubr.f32.gmra.mrb[0].mxu0 %v527
        %v770 = vpop.f32.mrb[0].mxu0
        %v771 = vadd.f32 %v548, %v770
        %v772 = vpop.f32.mrb[0].mxu0
        %773 = vdwg.mxu0
        %v774 = vmax.f32 %v616, 0.0
        %v775 = vmax.f32 %v621, 0.0
        %v776 = vmax.f32 %v626, 0.0
        %v777 = vmax.f32 %v631, 0.0
        %v778 = vmax.f32 %v636, 0.0
        %v779 = vmax.f32 %v641, 0.0
        %v780 = vmax.f32 %v646, 0.0
        %v781 = vmax.f32 %v651, 0.0
        %v782 = vmax.f32 %v656, 0.0
        %v783 = vmax.f32 %v661, 0.0
        %v784 = vmax.f32 %v666, 0.0
        %v785 = vmax.f32 %v671, 0.0
        %v786 = vmax.f32 %v676, 0.0
        %v787 = vmax.f32 %v681, 0.0
        %v788 = vmax.f32 %v686, 0.0
        %v789 = vmax.f32 %v691, 0.0
        %v790 = vmax.f32 %v696, 0.0
        %v791 = vmax.f32 %v701, 0.0
        %v792 = vmax.f32 %v706, 0.0
        %v793 = vmax.f32 %v711, 0.0
        %v794 = vmax.f32 %v716, 0.0
        %v795 = vmax.f32 %v721, 0.0
        %v796 = vmax.f32 %v726, 0.0
        %v797 = vmax.f32 %v731, 0.0
        %v798 = vmax.f32 %v736, 0.0
        %v799 = vmax.f32 %v741, 0.0
        %v800 = vmax.f32 %v746, 0.0
        %v801 = vmax.f32 %v751, 0.0
        %v802 = vmax.f32 %v756, 0.0
        %v803 = vmax.f32 %v761, 0.0
        %v804 = vmax.f32 %v766, 0.0
        %v805 = vmax.f32 %v771, 0.0
        %s806 = scalar_lea.vmem [#allocation5], 256
        %v807 = vld [vmem:[%s806] sm:$0xff]
        %v808 = vld [vmem:[%s806 + $0x8] sm:$0xff]
        %v809 = vld [vmem:[%s806 + $0x10] sm:$0xff]
        %v810 = vld [vmem:[%s806 + $0x18] sm:$0xff]
        %v811 = vld [vmem:[%s806 + $0x20] sm:$0xff]
        %v812 = vld [vmem:[%s806 + $0x28] sm:$0xff]
        %v813 = vld [vmem:[%s806 + $0x30] sm:$0xff]
        %v814 = vld [vmem:[%s806 + $0x38] sm:$0xff]
        %v815 = vld [vmem:[%s806 + $0x40] sm:$0xff]
        %v816 = vld [vmem:[%s806 + $0x48] sm:$0xff]
        %v817 = vld [vmem:[%s806 + $0x50] sm:$0xff]
        %v818 = vld [vmem:[%s806 + $0x58] sm:$0xff]
        %v819 = vld [vmem:[%s806 + $0x60] sm:$0xff]
        %v820 = vld [vmem:[%s806 + $0x68] sm:$0xff]
        %v821 = vld [vmem:[%s806 + $0x70] sm:$0xff]
        %v822 = vld [vmem:[%s806 + $0x78] sm:$0xff]
        %v823 = vlaneseq
        %v824 = vshrl.u32 %v823, 7
        %v825 = vsub.s32 2, %v824
        %v826 = vrot.slane %v218, %v825
        %827 = vmatprep.subr.mxu0 0.0
        %828 = vmatpush1.msra.mxu0 %v807
        %829 = vmatprep.subr.mxu0 0.0
        %830 = vmatpush1.msra.mxu0 %v808
        %831 = vmatprep.subr.mxu0 0.0
        %832 = vmatpush1.msra.mxu0 %v809
        %833 = vmatprep.subr.mxu0 0.0
        %834 = vmatpush1.msra.mxu0 %v810
        %835 = vmatprep.subr.mxu0 0.0
        %836 = vmatpush1.msra.mxu0 %v811
        %837 = vmatprep.subr.mxu0 0.0
        %838 = vmatpush1.msra.mxu0 %v812
        %839 = vmatprep.subr.mxu0 0.0
        %840 = vmatpush1.msra.mxu0 %v813
        %841 = vmatprep.subr.mxu0 0.0
        %842 = vmatpush1.msra.mxu0 %v814
        %843 = vmatprep.subr.mxu0 0.0
        %844 = vmatpush1.msra.mxu0 %v815
        %845 = vmatprep.subr.mxu0 0.0
        %846 = vmatpush1.msra.mxu0 %v816
        %847 = vmatprep.subr.mxu0 0.0
        %848 = vmatpush1.msra.mxu0 %v817
        %849 = vmatprep.subr.mxu0 0.0
        %850 = vmatpush1.msra.mxu0 %v818
        %851 = vmatprep.subr.mxu0 0.0
        %852 = vmatpush1.msra.mxu0 %v819
        %853 = vmatprep.subr.mxu0 0.0
        %854 = vmatpush1.msra.mxu0 %v820
        %855 = vmatprep.subr.mxu0 0.0
        %856 = vmatpush1.msra.mxu0 %v821
        %857 = vmatprep.subr.mxu0 0.0
        %858 = vmatpush1.msra.mxu0 %v822
        %859 = vmatprep.subr.mxu0 0.0
        %860 = vmatpush1.msra.mxu0 0.0
        %861 = vmatprep.subr.mxu0 0.0
        %862 = vmatpush1.msra.mxu0 0.0
        %863 = vmatprep.subr.mxu0 0.0
        %864 = vmatpush1.msra.mxu0 0.0
        %865 = vmatprep.subr.mxu0 0.0
        %866 = vmatpush1.msra.mxu0 0.0
        %867 = vmatprep.subr.mxu0 0.0
        %868 = vmatpush1.msra.mxu0 0.0
        %869 = vmatprep.subr.mxu0 0.0
        %870 = vmatpush1.msra.mxu0 0.0
        %871 = vmatprep.subr.mxu0 0.0
        %872 = vmatpush1.msra.mxu0 0.0
        %873 = vmatprep.subr.mxu0 0.0
        %874 = vmatpush1.msra.mxu0 0.0
        %875 = vmatprep.subr.mxu0 0.0
        %876 = vmatpush1.msra.mxu0 0.0
        %877 = vmatprep.subr.mxu0 0.0
        %878 = vmatpush1.msra.mxu0 0.0
        %879 = vmatprep.subr.mxu0 0.0
        %880 = vmatpush1.msra.mxu0 0.0
        %881 = vmatprep.subr.mxu0 0.0
        %882 = vmatpush1.msra.mxu0 0.0
        %883 = vmatprep.subr.mxu0 0.0
        %884 = vmatpush1.msra.mxu0 0.0
        %885 = vmatprep.subr.mxu0 0.0
        %886 = vmatpush1.msra.mxu0 0.0
        %887 = vmatprep.subr.mxu0 0.0
        %888 = vmatpush1.msra.mxu0 0.0
        %889 = vmatprep.subr.mxu0 0.0
        %890 = vmatpush1.msra.mxu0 0.0
        %891 = vmatprep.mubr.f32.mxu0 0.0
        %892 = vmatmul.mubr.f32.gmra.mrb[0].mxu0 %v774
        %v893 = vpop.f32.mrb[0].mxu0
        %v894 = vadd.f32 %v826, %v893
        %v895 = vpop.f32.mrb[0].mxu0
        %896 = vmatprep.mubr.f32.mxu0 0.0
        %897 = vmatmul.mubr.f32.gmra.mrb[0].mxu0 %v775
        %v898 = vpop.f32.mrb[0].mxu0
        %v899 = vadd.f32 %v826, %v898
        %v900 = vpop.f32.mrb[0].mxu0
        %901 = vmatprep.mubr.f32.mxu0 0.0
        %902 = vmatmul.mubr.f32.gmra.mrb[0].mxu0 %v776
        %v903 = vpop.f32.mrb[0].mxu0
        %v904 = vadd.f32 %v826, %v903
        %v905 = vpop.f32.mrb[0].mxu0
        %906 = vmatprep.mubr.f32.mxu0 0.0
        %907 = vmatmul.mubr.f32.gmra.mrb[0].mxu0 %v777
        %v908 = vpop.f32.mrb[0].mxu0
        %v909 = vadd.f32 %v826, %v908
        %v910 = vpop.f32.mrb[0].mxu0
        %911 = vmatprep.mubr.f32.mxu0 0.0
        %912 = vmatmul.mubr.f32.gmra.mrb[0].mxu0 %v778
        %v913 = vpop.f32.mrb[0].mxu0
        %v914 = vadd.f32 %v826, %v913
        %v915 = vpop.f32.mrb[0].mxu0
        %916 = vmatprep.mubr.f32.mxu0 0.0
        %917 = vmatmul.mubr.f32.gmra.mrb[0].mxu0 %v779
        %v918 = vpop.f32.mrb[0].mxu0
        %v919 = vadd.f32 %v826, %v918
        %v920 = vpop.f32.mrb[0].mxu0
        %921 = vmatprep.mubr.f32.mxu0 0.0
        %922 = vmatmul.mubr.f32.gmra.mrb[0].mxu0 %v780
        %v923 = vpop.f32.mrb[0].mxu0
        %v924 = vadd.f32 %v826, %v923
        %v925 = vpop.f32.mrb[0].mxu0
        %926 = vmatprep.mubr.f32.mxu0 0.0
        %927 = vmatmul.mubr.f32.gmra.mrb[0].mxu0 %v781
        %v928 = vpop.f32.mrb[0].mxu0
        %v929 = vadd.f32 %v826, %v928
        %v930 = vpop.f32.mrb[0].mxu0
        %931 = vmatprep.mubr.f32.mxu0 0.0
        %932 = vmatmul.mubr.f32.gmra.mrb[0].mxu0 %v782
        %v933 = vpop.f32.mrb[0].mxu0
        %v934 = vadd.f32 %v826, %v933
        %v935 = vpop.f32.mrb[0].mxu0
        %936 = vmatprep.mubr.f32.mxu0 0.0
        %937 = vmatmul.mubr.f32.gmra.mrb[0].mxu0 %v783
        %v938 = vpop.f32.mrb[0].mxu0
        %v939 = vadd.f32 %v826, %v938
        %v940 = vpop.f32.mrb[0].mxu0
        %941 = vmatprep.mubr.f32.mxu0 0.0
        %942 = vmatmul.mubr.f32.gmra.mrb[0].mxu0 %v784
        %v943 = vpop.f32.mrb[0].mxu0
        %v944 = vadd.f32 %v826, %v943
        %v945 = vpop.f32.mrb[0].mxu0
        %946 = vmatprep.mubr.f32.mxu0 0.0
        %947 = vmatmul.mubr.f32.gmra.mrb[0].mxu0 %v785
        %v948 = vpop.f32.mrb[0].mxu0
        %v949 = vadd.f32 %v826, %v948
        %v950 = vpop.f32.mrb[0].mxu0
        %951 = vmatprep.mubr.f32.mxu0 0.0
        %952 = vmatmul.mubr.f32.gmra.mrb[0].mxu0 %v786
        %v953 = vpop.f32.mrb[0].mxu0
        %v954 = vadd.f32 %v826, %v953
        %v955 = vpop.f32.mrb[0].mxu0
        %956 = vmatprep.mubr.f32.mxu0 0.0
        %957 = vmatmul.mubr.f32.gmra.mrb[0].mxu0 %v787
        %v958 = vpop.f32.mrb[0].mxu0
        %v959 = vadd.f32 %v826, %v958
        %v960 = vpop.f32.mrb[0].mxu0
        %961 = vmatprep.mubr.f32.mxu0 0.0
        %962 = vmatmul.mubr.f32.gmra.mrb[0].mxu0 %v788
        %v963 = vpop.f32.mrb[0].mxu0
        %v964 = vadd.f32 %v826, %v963
        %v965 = vpop.f32.mrb[0].mxu0
        %966 = vmatprep.mubr.f32.mxu0 0.0
        %967 = vmatmul.mubr.f32.gmra.mrb[0].mxu0 %v789
        %v968 = vpop.f32.mrb[0].mxu0
        %v969 = vadd.f32 %v826, %v968
        %v970 = vpop.f32.mrb[0].mxu0
        %971 = vmatprep.mubr.f32.mxu0 0.0
        %972 = vmatmul.mubr.f32.gmra.mrb[0].mxu0 %v790
        %v973 = vpop.f32.mrb[0].mxu0
        %v974 = vadd.f32 %v826, %v973
        %v975 = vpop.f32.mrb[0].mxu0
        %976 = vmatprep.mubr.f32.mxu0 0.0
        %977 = vmatmul.mubr.f32.gmra.mrb[0].mxu0 %v791
        %v978 = vpop.f32.mrb[0].mxu0
        %v979 = vadd.f32 %v826, %v978
        %v980 = vpop.f32.mrb[0].mxu0
        %981 = vmatprep.mubr.f32.mxu0 0.0
        %982 = vmatmul.mubr.f32.gmra.mrb[0].mxu0 %v792
        %v983 = vpop.f32.mrb[0].mxu0
        %v984 = vadd.f32 %v826, %v983
        %v985 = vpop.f32.mrb[0].mxu0
        %986 = vmatprep.mubr.f32.mxu0 0.0
        %987 = vmatmul.mubr.f32.gmra.mrb[0].mxu0 %v793
        %v988 = vpop.f32.mrb[0].mxu0
        %v989 = vadd.f32 %v826, %v988
        %v990 = vpop.f32.mrb[0].mxu0
        %991 = vmatprep.mubr.f32.mxu0 0.0
        %992 = vmatmul.mubr.f32.gmra.mrb[0].mxu0 %v794
        %v993 = vpop.f32.mrb[0].mxu0
        %v994 = vadd.f32 %v826, %v993
        %v995 = vpop.f32.mrb[0].mxu0
        %996 = vmatprep.mubr.f32.mxu0 0.0
        %997 = vmatmul.mubr.f32.gmra.mrb[0].mxu0 %v795
        %v998 = vpop.f32.mrb[0].mxu0
        %v999 = vadd.f32 %v826, %v998
        %v1000 = vpop.f32.mrb[0].mxu0
        %1001 = vmatprep.mubr.f32.mxu0 0.0
        %1002 = vmatmul.mubr.f32.gmra.mrb[0].mxu0 %v796
        %v1003 = vpop.f32.mrb[0].mxu0
        %v1004 = vadd.f32 %v826, %v1003
        %v1005 = vpop.f32.mrb[0].mxu0
        %1006 = vmatprep.mubr.f32.mxu0 0.0
        %1007 = vmatmul.mubr.f32.gmra.mrb[0].mxu0 %v797
        %v1008 = vpop.f32.mrb[0].mxu0
        %v1009 = vadd.f32 %v826, %v1008
        %v1010 = vpop.f32.mrb[0].mxu0
        %1011 = vmatprep.mubr.f32.mxu0 0.0
        %1012 = vmatmul.mubr.f32.gmra.mrb[0].mxu0 %v798
        %v1013 = vpop.f32.mrb[0].mxu0
        %v1014 = vadd.f32 %v826, %v1013
        %v1015 = vpop.f32.mrb[0].mxu0
        %1016 = vmatprep.mubr.f32.mxu0 0.0
        %1017 = vmatmul.mubr.f32.gmra.mrb[0].mxu0 %v799
        %v1018 = vpop.f32.mrb[0].mxu0
        %v1019 = vadd.f32 %v826, %v1018
        %v1020 = vpop.f32.mrb[0].mxu0
        %1021 = vmatprep.mubr.f32.mxu0 0.0
        %1022 = vmatmul.mubr.f32.gmra.mrb[0].mxu0 %v800
        %v1023 = vpop.f32.mrb[0].mxu0
        %v1024 = vadd.f32 %v826, %v1023
        %v1025 = vpop.f32.mrb[0].mxu0
        %1026 = vmatprep.mubr.f32.mxu0 0.0
        %1027 = vmatmul.mubr.f32.gmra.mrb[0].mxu0 %v801
        %v1028 = vpop.f32.mrb[0].mxu0
        %v1029 = vadd.f32 %v826, %v1028
        %v1030 = vpop.f32.mrb[0].mxu0
        %1031 = vmatprep.mubr.f32.mxu0 0.0
        %1032 = vmatmul.mubr.f32.gmra.mrb[0].mxu0 %v802
        %v1033 = vpop.f32.mrb[0].mxu0
        %v1034 = vadd.f32 %v826, %v1033
        %v1035 = vpop.f32.mrb[0].mxu0
        %1036 = vmatprep.mubr.f32.mxu0 0.0
        %1037 = vmatmul.mubr.f32.gmra.mrb[0].mxu0 %v803
        %v1038 = vpop.f32.mrb[0].mxu0
        %v1039 = vadd.f32 %v826, %v1038
        %v1040 = vpop.f32.mrb[0].mxu0
        %1041 = vmatprep.mubr.f32.mxu0 0.0
        %1042 = vmatmul.mubr.f32.gmra.mrb[0].mxu0 %v804
        %v1043 = vpop.f32.mrb[0].mxu0
        %v1044 = vadd.f32 %v826, %v1043
        %v1045 = vpop.f32.mrb[0].mxu0
        %1046 = vmatprep.mubr.f32.mxu0 0.0
        %1047 = vmatmul.mubr.f32.gmra.mrb[0].mxu0 %v805
        %v1048 = vpop.f32.mrb[0].mxu0
        %v1049 = vadd.f32 %v826, %v1048
        %v1050 = vpop.f32.mrb[0].mxu0
        %1051 = vdwg.mxu0
        %v1052 = vmax.f32 %v894, 0.0
        %v1053 = vmax.f32 %v899, 0.0
        %v1054 = vmax.f32 %v904, 0.0
        %v1055 = vmax.f32 %v909, 0.0
        %v1056 = vmax.f32 %v914, 0.0
        %v1057 = vmax.f32 %v919, 0.0
        %v1058 = vmax.f32 %v924, 0.0
        %v1059 = vmax.f32 %v929, 0.0
        %v1060 = vmax.f32 %v934, 0.0
        %v1061 = vmax.f32 %v939, 0.0
        %v1062 = vmax.f32 %v944, 0.0
        %v1063 = vmax.f32 %v949, 0.0
        %v1064 = vmax.f32 %v954, 0.0
        %v1065 = vmax.f32 %v959, 0.0
        %v1066 = vmax.f32 %v964, 0.0
        %v1067 = vmax.f32 %v969, 0.0
        %v1068 = vmax.f32 %v974, 0.0
        %v1069 = vmax.f32 %v979, 0.0
        %v1070 = vmax.f32 %v984, 0.0
        %v1071 = vmax.f32 %v989, 0.0
        %v1072 = vmax.f32 %v994, 0.0
        %v1073 = vmax.f32 %v999, 0.0
        %v1074 = vmax.f32 %v1004, 0.0
        %v1075 = vmax.f32 %v1009, 0.0
        %v1076 = vmax.f32 %v1014, 0.0
        %v1077 = vmax.f32 %v1019, 0.0
        %v1078 = vmax.f32 %v1024, 0.0
        %v1079 = vmax.f32 %v1029, 0.0
        %v1080 = vmax.f32 %v1034, 0.0
        %v1081 = vmax.f32 %v1039, 0.0
        %v1082 = vmax.f32 %v1044, 0.0
        %v1083 = vmax.f32 %v1049, 0.0
        %s1084 = scalar_lea.vmem [#allocation5], 384
        %v1085 = vld [vmem:[%s1084] sm:$0xff]
        %v1086 = vld [vmem:[%s1084 + $0x8] sm:$0xff]
        %v1087 = vld [vmem:[%s1084 + $0x10] sm:$0xff]
        %v1088 = vld [vmem:[%s1084 + $0x18] sm:$0xff]
        %v1089 = vld [vmem:[%s1084 + $0x20] sm:$0xff]
        %v1090 = vld [vmem:[%s1084 + $0x28] sm:$0xff]
        %v1091 = vld [vmem:[%s1084 + $0x30] sm:$0xff]
        %v1092 = vld [vmem:[%s1084 + $0x38] sm:$0xff]
        %v1093 = vld [vmem:[%s1084 + $0x40] sm:$0xff]
        %v1094 = vld [vmem:[%s1084 + $0x48] sm:$0xff]
        %v1095 = vld [vmem:[%s1084 + $0x50] sm:$0xff]
        %v1096 = vld [vmem:[%s1084 + $0x58] sm:$0xff]
        %v1097 = vld [vmem:[%s1084 + $0x60] sm:$0xff]
        %v1098 = vld [vmem:[%s1084 + $0x68] sm:$0xff]
        %v1099 = vld [vmem:[%s1084 + $0x70] sm:$0xff]
        %v1100 = vld [vmem:[%s1084 + $0x78] sm:$0xff]
        %v1101 = vlaneseq
        %v1102 = vshrl.u32 %v1101, 7
        %v1103 = vsub.s32 3, %v1102
        %v1104 = vrot.slane %v218, %v1103
        %1105 = vmatprep.subr.mxu0 0.0
        %1106 = vmatpush1.msra.mxu0 %v1085
        %1107 = vmatprep.subr.mxu0 0.0
        %1108 = vmatpush1.msra.mxu0 %v1086
        %1109 = vmatprep.subr.mxu0 0.0
        %1110 = vmatpush1.msra.mxu0 %v1087
        %1111 = vmatprep.subr.mxu0 0.0
        %1112 = vmatpush1.msra.mxu0 %v1088
        %1113 = vmatprep.subr.mxu0 0.0
        %1114 = vmatpush1.msra.mxu0 %v1089
        %1115 = vmatprep.subr.mxu0 0.0
        %1116 = vmatpush1.msra.mxu0 %v1090
        %1117 = vmatprep.subr.mxu0 0.0
        %1118 = vmatpush1.msra.mxu0 %v1091
        %1119 = vmatprep.subr.mxu0 0.0
        %1120 = vmatpush1.msra.mxu0 %v1092
        %1121 = vmatprep.subr.mxu0 0.0
        %1122 = vmatpush1.msra.mxu0 %v1093
        %1123 = vmatprep.subr.mxu0 0.0
        %1124 = vmatpush1.msra.mxu0 %v1094
        %1125 = vmatprep.subr.mxu0 0.0
        %1126 = vmatpush1.msra.mxu0 %v1095
        %1127 = vmatprep.subr.mxu0 0.0
        %1128 = vmatpush1.msra.mxu0 %v1096
        %1129 = vmatprep.subr.mxu0 0.0
        %1130 = vmatpush1.msra.mxu0 %v1097
        %1131 = vmatprep.subr.mxu0 0.0
        %1132 = vmatpush1.msra.mxu0 %v1098
        %1133 = vmatprep.subr.mxu0 0.0
        %1134 = vmatpush1.msra.mxu0 %v1099
        %1135 = vmatprep.subr.mxu0 0.0
        %1136 = vmatpush1.msra.mxu0 %v1100
        %1137 = vmatprep.subr.mxu0 0.0
        %1138 = vmatpush1.msra.mxu0 0.0
        %1139 = vmatprep.subr.mxu0 0.0
        %1140 = vmatpush1.msra.mxu0 0.0
        %1141 = vmatprep.subr.mxu0 0.0
        %1142 = vmatpush1.msra.mxu0 0.0
        %1143 = vmatprep.subr.mxu0 0.0
        %1144 = vmatpush1.msra.mxu0 0.0
        %1145 = vmatprep.subr.mxu0 0.0
        %1146 = vmatpush1.msra.mxu0 0.0
        %1147 = vmatprep.subr.mxu0 0.0
        %1148 = vmatpush1.msra.mxu0 0.0
        %1149 = vmatprep.subr.mxu0 0.0
        %1150 = vmatpush1.msra.mxu0 0.0
        %1151 = vmatprep.subr.mxu0 0.0
        %1152 = vmatpush1.msra.mxu0 0.0
        %1153 = vmatprep.subr.mxu0 0.0
        %1154 = vmatpush1.msra.mxu0 0.0
        %1155 = vmatprep.subr.mxu0 0.0
        %1156 = vmatpush1.msra.mxu0 0.0
        %1157 = vmatprep.subr.mxu0 0.0
        %1158 = vmatpush1.msra.mxu0 0.0
        %1159 = vmatprep.subr.mxu0 0.0
        %1160 = vmatpush1.msra.mxu0 0.0
        %1161 = vmatprep.subr.mxu0 0.0
        %1162 = vmatpush1.msra.mxu0 0.0
        %1163 = vmatprep.subr.mxu0 0.0
        %1164 = vmatpush1.msra.mxu0 0.0
        %1165 = vmatprep.subr.mxu0 0.0
        %1166 = vmatpush1.msra.mxu0 0.0
        %1167 = vmatprep.subr.mxu0 0.0
        %1168 = vmatpush1.msra.mxu0 0.0
        %1169 = vmatprep.mubr.f32.mxu0 0.0
        %1170 = vmatmul.mubr.f32.gmra.mrb[0].mxu0 %v1052
        %v1171 = vpop.f32.mrb[0].mxu0
        %v1172 = vadd.f32 %v1104, %v1171
        %v1173 = vpop.f32.mrb[0].mxu0
        %1174 = vmatprep.mubr.f32.mxu0 0.0
        %1175 = vmatmul.mubr.f32.gmra.mrb[0].mxu0 %v1053
        %v1176 = vpop.f32.mrb[0].mxu0
        %v1177 = vadd.f32 %v1104, %v1176
        %v1178 = vpop.f32.mrb[0].mxu0
        %1179 = vmatprep.mubr.f32.mxu0 0.0
        %1180 = vmatmul.mubr.f32.gmra.mrb[0].mxu0 %v1054
        %v1181 = vpop.f32.mrb[0].mxu0
        %v1182 = vadd.f32 %v1104, %v1181
        %v1183 = vpop.f32.mrb[0].mxu0
        %1184 = vmatprep.mubr.f32.mxu0 0.0
        %1185 = vmatmul.mubr.f32.gmra.mrb[0].mxu0 %v1055
        %v1186 = vpop.f32.mrb[0].mxu0
        %v1187 = vadd.f32 %v1104, %v1186
        %v1188 = vpop.f32.mrb[0].mxu0
        %1189 = vmatprep.mubr.f32.mxu0 0.0
        %1190 = vmatmul.mubr.f32.gmra.mrb[0].mxu0 %v1056
        %v1191 = vpop.f32.mrb[0].mxu0
        %v1192 = vadd.f32 %v1104, %v1191
        %v1193 = vpop.f32.mrb[0].mxu0
        %1194 = vmatprep.mubr.f32.mxu0 0.0
        %1195 = vmatmul.mubr.f32.gmra.mrb[0].mxu0 %v1057
        %v1196 = vpop.f32.mrb[0].mxu0
        %v1197 = vadd.f32 %v1104, %v1196
        %v1198 = vpop.f32.mrb[0].mxu0
        %1199 = vmatprep.mubr.f32.mxu0 0.0
        %1200 = vmatmul.mubr.f32.gmra.mrb[0].mxu0 %v1058
        %v1201 = vpop.f32.mrb[0].mxu0
        %v1202 = vadd.f32 %v1104, %v1201
        %v1203 = vpop.f32.mrb[0].mxu0
        %1204 = vmatprep.mubr.f32.mxu0 0.0
        %1205 = vmatmul.mubr.f32.gmra.mrb[0].mxu0 %v1059
        %v1206 = vpop.f32.mrb[0].mxu0
        %v1207 = vadd.f32 %v1104, %v1206
        %v1208 = vpop.f32.mrb[0].mxu0
        %1209 = vmatprep.mubr.f32.mxu0 0.0
        %1210 = vmatmul.mubr.f32.gmra.mrb[0].mxu0 %v1060
        %v1211 = vpop.f32.mrb[0].mxu0
        %v1212 = vadd.f32 %v1104, %v1211
        %v1213 = vpop.f32.mrb[0].mxu0
        %1214 = vmatprep.mubr.f32.mxu0 0.0
        %1215 = vmatmul.mubr.f32.gmra.mrb[0].mxu0 %v1061
        %v1216 = vpop.f32.mrb[0].mxu0
        %v1217 = vadd.f32 %v1104, %v1216
        %v1218 = vpop.f32.mrb[0].mxu0
        %1219 = vmatprep.mubr.f32.mxu0 0.0
        %1220 = vmatmul.mubr.f32.gmra.mrb[0].mxu0 %v1062
        %v1221 = vpop.f32.mrb[0].mxu0
        %v1222 = vadd.f32 %v1104, %v1221
        %v1223 = vpop.f32.mrb[0].mxu0
        %1224 = vmatprep.mubr.f32.mxu0 0.0
        %1225 = vmatmul.mubr.f32.gmra.mrb[0].mxu0 %v1063
        %v1226 = vpop.f32.mrb[0].mxu0
        %v1227 = vadd.f32 %v1104, %v1226
        %v1228 = vpop.f32.mrb[0].mxu0
        %1229 = vmatprep.mubr.f32.mxu0 0.0
        %1230 = vmatmul.mubr.f32.gmra.mrb[0].mxu0 %v1064
        %v1231 = vpop.f32.mrb[0].mxu0
        %v1232 = vadd.f32 %v1104, %v1231
        %v1233 = vpop.f32.mrb[0].mxu0
        %1234 = vmatprep.mubr.f32.mxu0 0.0
        %1235 = vmatmul.mubr.f32.gmra.mrb[0].mxu0 %v1065
        %v1236 = vpop.f32.mrb[0].mxu0
        %v1237 = vadd.f32 %v1104, %v1236
        %v1238 = vpop.f32.mrb[0].mxu0
        %1239 = vmatprep.mubr.f32.mxu0 0.0
        %1240 = vmatmul.mubr.f32.gmra.mrb[0].mxu0 %v1066
        %v1241 = vpop.f32.mrb[0].mxu0
        %v1242 = vadd.f32 %v1104, %v1241
        %v1243 = vpop.f32.mrb[0].mxu0
        %1244 = vmatprep.mubr.f32.mxu0 0.0
        %1245 = vmatmul.mubr.f32.gmra.mrb[0].mxu0 %v1067
        %v1246 = vpop.f32.mrb[0].mxu0
        %v1247 = vadd.f32 %v1104, %v1246
        %v1248 = vpop.f32.mrb[0].mxu0
        %1249 = vmatprep.mubr.f32.mxu0 0.0
        %1250 = vmatmul.mubr.f32.gmra.mrb[0].mxu0 %v1068
        %v1251 = vpop.f32.mrb[0].mxu0
        %v1252 = vadd.f32 %v1104, %v1251
        %v1253 = vpop.f32.mrb[0].mxu0
        %1254 = vmatprep.mubr.f32.mxu0 0.0
        %1255 = vmatmul.mubr.f32.gmra.mrb[0].mxu0 %v1069
        %v1256 = vpop.f32.mrb[0].mxu0
        %v1257 = vadd.f32 %v1104, %v1256
        %v1258 = vpop.f32.mrb[0].mxu0
        %1259 = vmatprep.mubr.f32.mxu0 0.0
        %1260 = vmatmul.mubr.f32.gmra.mrb[0].mxu0 %v1070
        %v1261 = vpop.f32.mrb[0].mxu0
        %v1262 = vadd.f32 %v1104, %v1261
        %v1263 = vpop.f32.mrb[0].mxu0
        %1264 = vmatprep.mubr.f32.mxu0 0.0
        %1265 = vmatmul.mubr.f32.gmra.mrb[0].mxu0 %v1071
        %v1266 = vpop.f32.mrb[0].mxu0
        %v1267 = vadd.f32 %v1104, %v1266
        %v1268 = vpop.f32.mrb[0].mxu0
        %1269 = vmatprep.mubr.f32.mxu0 0.0
        %1270 = vmatmul.mubr.f32.gmra.mrb[0].mxu0 %v1072
        %v1271 = vpop.f32.mrb[0].mxu0
        %v1272 = vadd.f32 %v1104, %v1271
        %v1273 = vpop.f32.mrb[0].mxu0
        %1274 = vmatprep.mubr.f32.mxu0 0.0
        %1275 = vmatmul.mubr.f32.gmra.mrb[0].mxu0 %v1073
        %v1276 = vpop.f32.mrb[0].mxu0
        %v1277 = vadd.f32 %v1104, %v1276
        %v1278 = vpop.f32.mrb[0].mxu0
        %1279 = vmatprep.mubr.f32.mxu0 0.0
        %1280 = vmatmul.mubr.f32.gmra.mrb[0].mxu0 %v1074
        %v1281 = vpop.f32.mrb[0].mxu0
        %v1282 = vadd.f32 %v1104, %v1281
        %v1283 = vpop.f32.mrb[0].mxu0
        %1284 = vmatprep.mubr.f32.mxu0 0.0
        %1285 = vmatmul.mubr.f32.gmra.mrb[0].mxu0 %v1075
        %v1286 = vpop.f32.mrb[0].mxu0
        %v1287 = vadd.f32 %v1104, %v1286
        %v1288 = vpop.f32.mrb[0].mxu0
        %1289 = vmatprep.mubr.f32.mxu0 0.0
        %1290 = vmatmul.mubr.f32.gmra.mrb[0].mxu0 %v1076
        %v1291 = vpop.f32.mrb[0].mxu0
        %v1292 = vadd.f32 %v1104, %v1291
        %v1293 = vpop.f32.mrb[0].mxu0
        %1294 = vmatprep.mubr.f32.mxu0 0.0
        %1295 = vmatmul.mubr.f32.gmra.mrb[0].mxu0 %v1077
        %v1296 = vpop.f32.mrb[0].mxu0
        %v1297 = vadd.f32 %v1104, %v1296
        %v1298 = vpop.f32.mrb[0].mxu0
        %1299 = vmatprep.mubr.f32.mxu0 0.0
        %1300 = vmatmul.mubr.f32.gmra.mrb[0].mxu0 %v1078
        %v1301 = vpop.f32.mrb[0].mxu0
        %v1302 = vadd.f32 %v1104, %v1301
        %v1303 = vpop.f32.mrb[0].mxu0
        %1304 = vmatprep.mubr.f32.mxu0 0.0
        %1305 = vmatmul.mubr.f32.gmra.mrb[0].mxu0 %v1079
        %v1306 = vpop.f32.mrb[0].mxu0
        %v1307 = vadd.f32 %v1104, %v1306
        %v1308 = vpop.f32.mrb[0].mxu0
        %1309 = vmatprep.mubr.f32.mxu0 0.0
        %1310 = vmatmul.mubr.f32.gmra.mrb[0].mxu0 %v1080
        %v1311 = vpop.f32.mrb[0].mxu0
        %v1312 = vadd.f32 %v1104, %v1311
        %v1313 = vpop.f32.mrb[0].mxu0
        %1314 = vmatprep.mubr.f32.mxu0 0.0
        %1315 = vmatmul.mubr.f32.gmra.mrb[0].mxu0 %v1081
        %v1316 = vpop.f32.mrb[0].mxu0
        %v1317 = vadd.f32 %v1104, %v1316
        %v1318 = vpop.f32.mrb[0].mxu0
        %1319 = vmatprep.mubr.f32.mxu0 0.0
        %1320 = vmatmul.mubr.f32.gmra.mrb[0].mxu0 %v1082
        %v1321 = vpop.f32.mrb[0].mxu0
        %v1322 = vadd.f32 %v1104, %v1321
        %v1323 = vpop.f32.mrb[0].mxu0
        %1324 = vmatprep.mubr.f32.mxu0 0.0
        %1325 = vmatmul.mubr.f32.gmra.mrb[0].mxu0 %v1083
        %v1326 = vpop.f32.mrb[0].mxu0
        %v1327 = vadd.f32 %v1104, %v1326
        %v1328 = vpop.f32.mrb[0].mxu0
        %1329 = vdwg.mxu0
        %v1330 = vmax.f32 %v1172, 0.0
        %v1331 = vmax.f32 %v1177, 0.0
        %v1332 = vmax.f32 %v1182, 0.0
        %v1333 = vmax.f32 %v1187, 0.0
        %v1334 = vmax.f32 %v1192, 0.0
        %v1335 = vmax.f32 %v1197, 0.0
        %v1336 = vmax.f32 %v1202, 0.0
        %v1337 = vmax.f32 %v1207, 0.0
        %v1338 = vmax.f32 %v1212, 0.0
        %v1339 = vmax.f32 %v1217, 0.0
        %v1340 = vmax.f32 %v1222, 0.0
        %v1341 = vmax.f32 %v1227, 0.0
        %v1342 = vmax.f32 %v1232, 0.0
        %v1343 = vmax.f32 %v1237, 0.0
        %v1344 = vmax.f32 %v1242, 0.0
        %v1345 = vmax.f32 %v1247, 0.0
        %v1346 = vmax.f32 %v1252, 0.0
        %v1347 = vmax.f32 %v1257, 0.0
        %v1348 = vmax.f32 %v1262, 0.0
        %v1349 = vmax.f32 %v1267, 0.0
        %v1350 = vmax.f32 %v1272, 0.0
        %v1351 = vmax.f32 %v1277, 0.0
        %v1352 = vmax.f32 %v1282, 0.0
        %v1353 = vmax.f32 %v1287, 0.0
        %v1354 = vmax.f32 %v1292, 0.0
        %v1355 = vmax.f32 %v1297, 0.0
        %v1356 = vmax.f32 %v1302, 0.0
        %v1357 = vmax.f32 %v1307, 0.0
        %v1358 = vmax.f32 %v1312, 0.0
        %v1359 = vmax.f32 %v1317, 0.0
        %v1360 = vmax.f32 %v1322, 0.0
        %v1361 = vmax.f32 %v1327, 0.0
        %s1362 = scalar_lea.vmem [#allocation5], 512
        %v1363 = vld [vmem:[%s1362] sm:$0xff]
        %v1364 = vld [vmem:[%s1362 + $0x8] sm:$0xff]
        %v1365 = vld [vmem:[%s1362 + $0x10] sm:$0xff]
        %v1366 = vld [vmem:[%s1362 + $0x18] sm:$0xff]
        %v1367 = vld [vmem:[%s1362 + $0x20] sm:$0xff]
        %v1368 = vld [vmem:[%s1362 + $0x28] sm:$0xff]
        %v1369 = vld [vmem:[%s1362 + $0x30] sm:$0xff]
        %v1370 = vld [vmem:[%s1362 + $0x38] sm:$0xff]
        %v1371 = vld [vmem:[%s1362 + $0x40] sm:$0xff]
        %v1372 = vld [vmem:[%s1362 + $0x48] sm:$0xff]
        %v1373 = vld [vmem:[%s1362 + $0x50] sm:$0xff]
        %v1374 = vld [vmem:[%s1362 + $0x58] sm:$0xff]
        %v1375 = vld [vmem:[%s1362 + $0x60] sm:$0xff]
        %v1376 = vld [vmem:[%s1362 + $0x68] sm:$0xff]
        %v1377 = vld [vmem:[%s1362 + $0x70] sm:$0xff]
        %v1378 = vld [vmem:[%s1362 + $0x78] sm:$0xff]
        %v1379 = vlaneseq
        %v1380 = vshrl.u32 %v1379, 7
        %v1381 = vsub.s32 4, %v1380
        %v1382 = vrot.slane %v218, %v1381
        %1383 = vmatprep.subr.mxu0 0.0
        %1384 = vmatpush1.msra.mxu0 %v1363
        %1385 = vmatprep.subr.mxu0 0.0
        %1386 = vmatpush1.msra.mxu0 %v1364
        %1387 = vmatprep.subr.mxu0 0.0
        %1388 = vmatpush1.msra.mxu0 %v1365
        %1389 = vmatprep.subr.mxu0 0.0
        %1390 = vmatpush1.msra.mxu0 %v1366
        %1391 = vmatprep.subr.mxu0 0.0
        %1392 = vmatpush1.msra.mxu0 %v1367
        %1393 = vmatprep.subr.mxu0 0.0
        %1394 = vmatpush1.msra.mxu0 %v1368
        %1395 = vmatprep.subr.mxu0 0.0
        %1396 = vmatpush1.msra.mxu0 %v1369
        %1397 = vmatprep.subr.mxu0 0.0
        %1398 = vmatpush1.msra.mxu0 %v1370
        %1399 = vmatprep.subr.mxu0 0.0
        %1400 = vmatpush1.msra.mxu0 %v1371
        %1401 = vmatprep.subr.mxu0 0.0
        %1402 = vmatpush1.msra.mxu0 %v1372
        %1403 = vmatprep.subr.mxu0 0.0
        %1404 = vmatpush1.msra.mxu0 %v1373
        %1405 = vmatprep.subr.mxu0 0.0
        %1406 = vmatpush1.msra.mxu0 %v1374
        %1407 = vmatprep.subr.mxu0 0.0
        %1408 = vmatpush1.msra.mxu0 %v1375
        %1409 = vmatprep.subr.mxu0 0.0
        %1410 = vmatpush1.msra.mxu0 %v1376
        %1411 = vmatprep.subr.mxu0 0.0
        %1412 = vmatpush1.msra.mxu0 %v1377
        %1413 = vmatprep.subr.mxu0 0.0
        %1414 = vmatpush1.msra.mxu0 %v1378
        %1415 = vmatprep.subr.mxu0 0.0
        %1416 = vmatpush1.msra.mxu0 0.0
        %1417 = vmatprep.subr.mxu0 0.0
        %1418 = vmatpush1.msra.mxu0 0.0
        %1419 = vmatprep.subr.mxu0 0.0
        %1420 = vmatpush1.msra.mxu0 0.0
        %1421 = vmatprep.subr.mxu0 0.0
        %1422 = vmatpush1.msra.mxu0 0.0
        %1423 = vmatprep.subr.mxu0 0.0
        %1424 = vmatpush1.msra.mxu0 0.0
        %1425 = vmatprep.subr.mxu0 0.0
        %1426 = vmatpush1.msra.mxu0 0.0
        %1427 = vmatprep.subr.mxu0 0.0
        %1428 = vmatpush1.msra.mxu0 0.0
        %1429 = vmatprep.subr.mxu0 0.0
        %1430 = vmatpush1.msra.mxu0 0.0
        %1431 = vmatprep.subr.mxu0 0.0
        %1432 = vmatpush1.msra.mxu0 0.0
        %1433 = vmatprep.subr.mxu0 0.0
        %1434 = vmatpush1.msra.mxu0 0.0
        %1435 = vmatprep.subr.mxu0 0.0
        %1436 = vmatpush1.msra.mxu0 0.0
        %1437 = vmatprep.subr.mxu0 0.0
        %1438 = vmatpush1.msra.mxu0 0.0
        %1439 = vmatprep.subr.mxu0 0.0
        %1440 = vmatpush1.msra.mxu0 0.0
        %1441 = vmatprep.subr.mxu0 0.0
        %1442 = vmatpush1.msra.mxu0 0.0
        %1443 = vmatprep.subr.mxu0 0.0
        %1444 = vmatpush1.msra.mxu0 0.0
        %1445 = vmatprep.subr.mxu0 0.0
        %1446 = vmatpush1.msra.mxu0 0.0
        %1447 = vmatprep.mubr.f32.mxu0 0.0
        %1448 = vmatmul.mubr.f32.gmra.mrb[0].mxu0 %v1330
        %v1449 = vpop.f32.mrb[0].mxu0
        %v1450 = vadd.f32 %v1382, %v1449
        %v1451 = vpop.f32.mrb[0].mxu0
        %1452 = vmatprep.mubr.f32.mxu0 0.0
        %1453 = vmatmul.mubr.f32.gmra.mrb[0].mxu0 %v1331
        %v1454 = vpop.f32.mrb[0].mxu0
        %v1455 = vadd.f32 %v1382, %v1454
        %v1456 = vpop.f32.mrb[0].mxu0
        %1457 = vmatprep.mubr.f32.mxu0 0.0
        %1458 = vmatmul.mubr.f32.gmra.mrb[0].mxu0 %v1332
        %v1459 = vpop.f32.mrb[0].mxu0
        %v1460 = vadd.f32 %v1382, %v1459
        %v1461 = vpop.f32.mrb[0].mxu0
        %1462 = vmatprep.mubr.f32.mxu0 0.0
        %1463 = vmatmul.mubr.f32.gmra.mrb[0].mxu0 %v1333
        %v1464 = vpop.f32.mrb[0].mxu0
        %v1465 = vadd.f32 %v1382, %v1464
        %v1466 = vpop.f32.mrb[0].mxu0
        %1467 = vmatprep.mubr.f32.mxu0 0.0
        %1468 = vmatmul.mubr.f32.gmra.mrb[0].mxu0 %v1334
        %v1469 = vpop.f32.mrb[0].mxu0
        %v1470 = vadd.f32 %v1382, %v1469
        %v1471 = vpop.f32.mrb[0].mxu0
        %1472 = vmatprep.mubr.f32.mxu0 0.0
        %1473 = vmatmul.mubr.f32.gmra.mrb[0].mxu0 %v1335
        %v1474 = vpop.f32.mrb[0].mxu0
        %v1475 = vadd.f32 %v1382, %v1474
        %v1476 = vpop.f32.mrb[0].mxu0
        %1477 = vmatprep.mubr.f32.mxu0 0.0
        %1478 = vmatmul.mubr.f32.gmra.mrb[0].mxu0 %v1336
        %v1479 = vpop.f32.mrb[0].mxu0
        %v1480 = vadd.f32 %v1382, %v1479
        %v1481 = vpop.f32.mrb[0].mxu0
        %1482 = vmatprep.mubr.f32.mxu0 0.0
        %1483 = vmatmul.mubr.f32.gmra.mrb[0].mxu0 %v1337
        %v1484 = vpop.f32.mrb[0].mxu0
        %v1485 = vadd.f32 %v1382, %v1484
        %v1486 = vpop.f32.mrb[0].mxu0
        %1487 = vmatprep.mubr.f32.mxu0 0.0
        %1488 = vmatmul.mubr.f32.gmra.mrb[0].mxu0 %v1338
        %v1489 = vpop.f32.mrb[0].mxu0
        %v1490 = vadd.f32 %v1382, %v1489
        %v1491 = vpop.f32.mrb[0].mxu0
        %1492 = vmatprep.mubr.f32.mxu0 0.0
        %1493 = vmatmul.mubr.f32.gmra.mrb[0].mxu0 %v1339
        %v1494 = vpop.f32.mrb[0].mxu0
        %v1495 = vadd.f32 %v1382, %v1494
        %v1496 = vpop.f32.mrb[0].mxu0
        %1497 = vmatprep.mubr.f32.mxu0 0.0
        %1498 = vmatmul.mubr.f32.gmra.mrb[0].mxu0 %v1340
        %v1499 = vpop.f32.mrb[0].mxu0
        %v1500 = vadd.f32 %v1382, %v1499
        %v1501 = vpop.f32.mrb[0].mxu0
        %1502 = vmatprep.mubr.f32.mxu0 0.0
        %1503 = vmatmul.mubr.f32.gmra.mrb[0].mxu0 %v1341
        %v1504 = vpop.f32.mrb[0].mxu0
        %v1505 = vadd.f32 %v1382, %v1504
        %v1506 = vpop.f32.mrb[0].mxu0
        %1507 = vmatprep.mubr.f32.mxu0 0.0
        %1508 = vmatmul.mubr.f32.gmra.mrb[0].mxu0 %v1342
        %v1509 = vpop.f32.mrb[0].mxu0
        %v1510 = vadd.f32 %v1382, %v1509
        %v1511 = vpop.f32.mrb[0].mxu0
        %1512 = vmatprep.mubr.f32.mxu0 0.0
        %1513 = vmatmul.mubr.f32.gmra.mrb[0].mxu0 %v1343
        %v1514 = vpop.f32.mrb[0].mxu0
        %v1515 = vadd.f32 %v1382, %v1514
        %v1516 = vpop.f32.mrb[0].mxu0
        %1517 = vmatprep.mubr.f32.mxu0 0.0
        %1518 = vmatmul.mubr.f32.gmra.mrb[0].mxu0 %v1344
        %v1519 = vpop.f32.mrb[0].mxu0
        %v1520 = vadd.f32 %v1382, %v1519
        %v1521 = vpop.f32.mrb[0].mxu0
        %1522 = vmatprep.mubr.f32.mxu0 0.0
        %1523 = vmatmul.mubr.f32.gmra.mrb[0].mxu0 %v1345
        %v1524 = vpop.f32.mrb[0].mxu0
        %v1525 = vadd.f32 %v1382, %v1524
        %v1526 = vpop.f32.mrb[0].mxu0
        %1527 = vmatprep.mubr.f32.mxu0 0.0
        %1528 = vmatmul.mubr.f32.gmra.mrb[0].mxu0 %v1346
        %v1529 = vpop.f32.mrb[0].mxu0
        %v1530 = vadd.f32 %v1382, %v1529
        %v1531 = vpop.f32.mrb[0].mxu0
        %1532 = vmatprep.mubr.f32.mxu0 0.0
        %1533 = vmatmul.mubr.f32.gmra.mrb[0].mxu0 %v1347
        %v1534 = vpop.f32.mrb[0].mxu0
        %v1535 = vadd.f32 %v1382, %v1534
        %v1536 = vpop.f32.mrb[0].mxu0
        %1537 = vmatprep.mubr.f32.mxu0 0.0
        %1538 = vmatmul.mubr.f32.gmra.mrb[0].mxu0 %v1348
        %v1539 = vpop.f32.mrb[0].mxu0
        %v1540 = vadd.f32 %v1382, %v1539
        %v1541 = vpop.f32.mrb[0].mxu0
        %1542 = vmatprep.mubr.f32.mxu0 0.0
        %1543 = vmatmul.mubr.f32.gmra.mrb[0].mxu0 %v1349
        %v1544 = vpop.f32.mrb[0].mxu0
        %v1545 = vadd.f32 %v1382, %v1544
        %v1546 = vpop.f32.mrb[0].mxu0
        %1547 = vmatprep.mubr.f32.mxu0 0.0
        %1548 = vmatmul.mubr.f32.gmra.mrb[0].mxu0 %v1350
        %v1549 = vpop.f32.mrb[0].mxu0
        %v1550 = vadd.f32 %v1382, %v1549
        %v1551 = vpop.f32.mrb[0].mxu0
        %1552 = vmatprep.mubr.f32.mxu0 0.0
        %1553 = vmatmul.mubr.f32.gmra.mrb[0].mxu0 %v1351
        %v1554 = vpop.f32.mrb[0].mxu0
        %v1555 = vadd.f32 %v1382, %v1554
        %v1556 = vpop.f32.mrb[0].mxu0
        %1557 = vmatprep.mubr.f32.mxu0 0.0
        %1558 = vmatmul.mubr.f32.gmra.mrb[0].mxu0 %v1352
        %v1559 = vpop.f32.mrb[0].mxu0
        %v1560 = vadd.f32 %v1382, %v1559
        %v1561 = vpop.f32.mrb[0].mxu0
        %1562 = vmatprep.mubr.f32.mxu0 0.0
        %1563 = vmatmul.mubr.f32.gmra.mrb[0].mxu0 %v1353
        %v1564 = vpop.f32.mrb[0].mxu0
        %v1565 = vadd.f32 %v1382, %v1564
        %v1566 = vpop.f32.mrb[0].mxu0
        %1567 = vmatprep.mubr.f32.mxu0 0.0
        %1568 = vmatmul.mubr.f32.gmra.mrb[0].mxu0 %v1354
        %v1569 = vpop.f32.mrb[0].mxu0
        %v1570 = vadd.f32 %v1382, %v1569
        %v1571 = vpop.f32.mrb[0].mxu0
        %1572 = vmatprep.mubr.f32.mxu0 0.0
        %1573 = vmatmul.mubr.f32.gmra.mrb[0].mxu0 %v1355
        %v1574 = vpop.f32.mrb[0].mxu0
        %v1575 = vadd.f32 %v1382, %v1574
        %v1576 = vpop.f32.mrb[0].mxu0
        %1577 = vmatprep.mubr.f32.mxu0 0.0
        %1578 = vmatmul.mubr.f32.gmra.mrb[0].mxu0 %v1356
        %v1579 = vpop.f32.mrb[0].mxu0
        %v1580 = vadd.f32 %v1382, %v1579
        %v1581 = vpop.f32.mrb[0].mxu0
        %1582 = vmatprep.mubr.f32.mxu0 0.0
        %1583 = vmatmul.mubr.f32.gmra.mrb[0].mxu0 %v1357
        %v1584 = vpop.f32.mrb[0].mxu0
        %v1585 = vadd.f32 %v1382, %v1584
        %v1586 = vpop.f32.mrb[0].mxu0
        %1587 = vmatprep.mubr.f32.mxu0 0.0
        %1588 = vmatmul.mubr.f32.gmra.mrb[0].mxu0 %v1358
        %v1589 = vpop.f32.mrb[0].mxu0
        %v1590 = vadd.f32 %v1382, %v1589
        %v1591 = vpop.f32.mrb[0].mxu0
        %1592 = vmatprep.mubr.f32.mxu0 0.0
        %1593 = vmatmul.mubr.f32.gmra.mrb[0].mxu0 %v1359
        %v1594 = vpop.f32.mrb[0].mxu0
        %v1595 = vadd.f32 %v1382, %v1594
        %v1596 = vpop.f32.mrb[0].mxu0
        %1597 = vmatprep.mubr.f32.mxu0 0.0
        %1598 = vmatmul.mubr.f32.gmra.mrb[0].mxu0 %v1360
        %v1599 = vpop.f32.mrb[0].mxu0
        %v1600 = vadd.f32 %v1382, %v1599
        %v1601 = vpop.f32.mrb[0].mxu0
        %1602 = vmatprep.mubr.f32.mxu0 0.0
        %1603 = vmatmul.mubr.f32.gmra.mrb[0].mxu0 %v1361
        %v1604 = vpop.f32.mrb[0].mxu0
        %v1605 = vadd.f32 %v1382, %v1604
        %v1606 = vpop.f32.mrb[0].mxu0
        %1607 = vdwg.mxu0
        %v1608 = vmax.f32 %v1450, 0.0
        %v1609 = vmax.f32 %v1455, 0.0
        %v1610 = vmax.f32 %v1460, 0.0
        %v1611 = vmax.f32 %v1465, 0.0
        %v1612 = vmax.f32 %v1470, 0.0
        %v1613 = vmax.f32 %v1475, 0.0
        %v1614 = vmax.f32 %v1480, 0.0
        %v1615 = vmax.f32 %v1485, 0.0
        %v1616 = vmax.f32 %v1490, 0.0
        %v1617 = vmax.f32 %v1495, 0.0
        %v1618 = vmax.f32 %v1500, 0.0
        %v1619 = vmax.f32 %v1505, 0.0
        %v1620 = vmax.f32 %v1510, 0.0
        %v1621 = vmax.f32 %v1515, 0.0
        %v1622 = vmax.f32 %v1520, 0.0
        %v1623 = vmax.f32 %v1525, 0.0
        %v1624 = vmax.f32 %v1530, 0.0
        %v1625 = vmax.f32 %v1535, 0.0
        %v1626 = vmax.f32 %v1540, 0.0
        %v1627 = vmax.f32 %v1545, 0.0
        %v1628 = vmax.f32 %v1550, 0.0
        %v1629 = vmax.f32 %v1555, 0.0
        %v1630 = vmax.f32 %v1560, 0.0
        %v1631 = vmax.f32 %v1565, 0.0
        %v1632 = vmax.f32 %v1570, 0.0
        %v1633 = vmax.f32 %v1575, 0.0
        %v1634 = vmax.f32 %v1580, 0.0
        %v1635 = vmax.f32 %v1585, 0.0
        %v1636 = vmax.f32 %v1590, 0.0
        %v1637 = vmax.f32 %v1595, 0.0
        %v1638 = vmax.f32 %v1600, 0.0
        %v1639 = vmax.f32 %v1605, 0.0
        %s1640 = scalar_lea.vmem [#allocation5], 640
        %v1641 = vld [vmem:[%s1640] sm:$0xff]
        %v1642 = vld [vmem:[%s1640 + $0x8] sm:$0xff]
        %v1643 = vld [vmem:[%s1640 + $0x10] sm:$0xff]
        %v1644 = vld [vmem:[%s1640 + $0x18] sm:$0xff]
        %v1645 = vld [vmem:[%s1640 + $0x20] sm:$0xff]
        %v1646 = vld [vmem:[%s1640 + $0x28] sm:$0xff]
        %v1647 = vld [vmem:[%s1640 + $0x30] sm:$0xff]
        %v1648 = vld [vmem:[%s1640 + $0x38] sm:$0xff]
        %v1649 = vld [vmem:[%s1640 + $0x40] sm:$0xff]
        %v1650 = vld [vmem:[%s1640 + $0x48] sm:$0xff]
        %v1651 = vld [vmem:[%s1640 + $0x50] sm:$0xff]
        %v1652 = vld [vmem:[%s1640 + $0x58] sm:$0xff]
        %v1653 = vld [vmem:[%s1640 + $0x60] sm:$0xff]
        %v1654 = vld [vmem:[%s1640 + $0x68] sm:$0xff]
        %v1655 = vld [vmem:[%s1640 + $0x70] sm:$0xff]
        %v1656 = vld [vmem:[%s1640 + $0x78] sm:$0xff]
        %v1657 = vlaneseq
        %v1658 = vshrl.u32 %v1657, 7
        %v1659 = vsub.s32 5, %v1658
        %v1660 = vrot.slane %v218, %v1659
        %1661 = vmatprep.subr.mxu0 0.0
        %1662 = vmatpush1.msra.mxu0 %v1641
        %1663 = vmatprep.subr.mxu0 0.0
        %1664 = vmatpush1.msra.mxu0 %v1642
        %1665 = vmatprep.subr.mxu0 0.0
        %1666 = vmatpush1.msra.mxu0 %v1643
        %1667 = vmatprep.subr.mxu0 0.0
        %1668 = vmatpush1.msra.mxu0 %v1644
        %1669 = vmatprep.subr.mxu0 0.0
        %1670 = vmatpush1.msra.mxu0 %v1645
        %1671 = vmatprep.subr.mxu0 0.0
        %1672 = vmatpush1.msra.mxu0 %v1646
        %1673 = vmatprep.subr.mxu0 0.0
        %1674 = vmatpush1.msra.mxu0 %v1647
        %1675 = vmatprep.subr.mxu0 0.0
        %1676 = vmatpush1.msra.mxu0 %v1648
        %1677 = vmatprep.subr.mxu0 0.0
        %1678 = vmatpush1.msra.mxu0 %v1649
        %1679 = vmatprep.subr.mxu0 0.0
        %1680 = vmatpush1.msra.mxu0 %v1650
        %1681 = vmatprep.subr.mxu0 0.0
        %1682 = vmatpush1.msra.mxu0 %v1651
        %1683 = vmatprep.subr.mxu0 0.0
        %1684 = vmatpush1.msra.mxu0 %v1652
        %1685 = vmatprep.subr.mxu0 0.0
        %1686 = vmatpush1.msra.mxu0 %v1653
        %1687 = vmatprep.subr.mxu0 0.0
        %1688 = vmatpush1.msra.mxu0 %v1654
        %1689 = vmatprep.subr.mxu0 0.0
        %1690 = vmatpush1.msra.mxu0 %v1655
        %1691 = vmatprep.subr.mxu0 0.0
        %1692 = vmatpush1.msra.mxu0 %v1656
        %1693 = vmatprep.subr.mxu0 0.0
        %1694 = vmatpush1.msra.mxu0 0.0
        %1695 = vmatprep.subr.mxu0 0.0
        %1696 = vmatpush1.msra.mxu0 0.0
        %1697 = vmatprep.subr.mxu0 0.0
        %1698 = vmatpush1.msra.mxu0 0.0
        %1699 = vmatprep.subr.mxu0 0.0
        %1700 = vmatpush1.msra.mxu0 0.0
        %1701 = vmatprep.subr.mxu0 0.0
        %1702 = vmatpush1.msra.mxu0 0.0
        %1703 = vmatprep.subr.mxu0 0.0
        %1704 = vmatpush1.msra.mxu0 0.0
        %1705 = vmatprep.subr.mxu0 0.0
        %1706 = vmatpush1.msra.mxu0 0.0
        %1707 = vmatprep.subr.mxu0 0.0
        %1708 = vmatpush1.msra.mxu0 0.0
        %1709 = vmatprep.subr.mxu0 0.0
        %1710 = vmatpush1.msra.mxu0 0.0
        %1711 = vmatprep.subr.mxu0 0.0
        %1712 = vmatpush1.msra.mxu0 0.0
        %1713 = vmatprep.subr.mxu0 0.0
        %1714 = vmatpush1.msra.mxu0 0.0
        %1715 = vmatprep.subr.mxu0 0.0
        %1716 = vmatpush1.msra.mxu0 0.0
        %1717 = vmatprep.subr.mxu0 0.0
        %1718 = vmatpush1.msra.mxu0 0.0
        %1719 = vmatprep.subr.mxu0 0.0
        %1720 = vmatpush1.msra.mxu0 0.0
        %1721 = vmatprep.subr.mxu0 0.0
        %1722 = vmatpush1.msra.mxu0 0.0
        %1723 = vmatprep.subr.mxu0 0.0
        %1724 = vmatpush1.msra.mxu0 0.0
        %1725 = vmatprep.mubr.f32.mxu0 0.0
        %1726 = vmatmul.mubr.f32.gmra.mrb[0].mxu0 %v1608
        %v1727 = vpop.f32.mrb[0].mxu0
        %v1728 = vadd.f32 %v1660, %v1727
        %v1729 = vpop.f32.mrb[0].mxu0
        %1730 = vmatprep.mubr.f32.mxu0 0.0
        %1731 = vmatmul.mubr.f32.gmra.mrb[0].mxu0 %v1609
        %v1732 = vpop.f32.mrb[0].mxu0
        %v1733 = vadd.f32 %v1660, %v1732
        %v1734 = vpop.f32.mrb[0].mxu0
        %1735 = vmatprep.mubr.f32.mxu0 0.0
        %1736 = vmatmul.mubr.f32.gmra.mrb[0].mxu0 %v1610
        %v1737 = vpop.f32.mrb[0].mxu0
        %v1738 = vadd.f32 %v1660, %v1737
        %v1739 = vpop.f32.mrb[0].mxu0
        %1740 = vmatprep.mubr.f32.mxu0 0.0
        %1741 = vmatmul.mubr.f32.gmra.mrb[0].mxu0 %v1611
        %v1742 = vpop.f32.mrb[0].mxu0
        %v1743 = vadd.f32 %v1660, %v1742
        %v1744 = vpop.f32.mrb[0].mxu0
        %1745 = vmatprep.mubr.f32.mxu0 0.0
        %1746 = vmatmul.mubr.f32.gmra.mrb[0].mxu0 %v1612
        %v1747 = vpop.f32.mrb[0].mxu0
        %v1748 = vadd.f32 %v1660, %v1747
        %v1749 = vpop.f32.mrb[0].mxu0
        %1750 = vmatprep.mubr.f32.mxu0 0.0
        %1751 = vmatmul.mubr.f32.gmra.mrb[0].mxu0 %v1613
        %v1752 = vpop.f32.mrb[0].mxu0
        %v1753 = vadd.f32 %v1660, %v1752
        %v1754 = vpop.f32.mrb[0].mxu0
        %1755 = vmatprep.mubr.f32.mxu0 0.0
        %1756 = vmatmul.mubr.f32.gmra.mrb[0].mxu0 %v1614
        %v1757 = vpop.f32.mrb[0].mxu0
        %v1758 = vadd.f32 %v1660, %v1757
        %v1759 = vpop.f32.mrb[0].mxu0
        %1760 = vmatprep.mubr.f32.mxu0 0.0
        %1761 = vmatmul.mubr.f32.gmra.mrb[0].mxu0 %v1615
        %v1762 = vpop.f32.mrb[0].mxu0
        %v1763 = vadd.f32 %v1660, %v1762
        %v1764 = vpop.f32.mrb[0].mxu0
        %1765 = vmatprep.mubr.f32.mxu0 0.0
        %1766 = vmatmul.mubr.f32.gmra.mrb[0].mxu0 %v1616
        %v1767 = vpop.f32.mrb[0].mxu0
        %v1768 = vadd.f32 %v1660, %v1767
        %v1769 = vpop.f32.mrb[0].mxu0
        %1770 = vmatprep.mubr.f32.mxu0 0.0
        %1771 = vmatmul.mubr.f32.gmra.mrb[0].mxu0 %v1617
        %v1772 = vpop.f32.mrb[0].mxu0
        %v1773 = vadd.f32 %v1660, %v1772
        %v1774 = vpop.f32.mrb[0].mxu0
        %1775 = vmatprep.mubr.f32.mxu0 0.0
        %1776 = vmatmul.mubr.f32.gmra.mrb[0].mxu0 %v1618
        %v1777 = vpop.f32.mrb[0].mxu0
        %v1778 = vadd.f32 %v1660, %v1777
        %v1779 = vpop.f32.mrb[0].mxu0
        %1780 = vmatprep.mubr.f32.mxu0 0.0
        %1781 = vmatmul.mubr.f32.gmra.mrb[0].mxu0 %v1619
        %v1782 = vpop.f32.mrb[0].mxu0
        %v1783 = vadd.f32 %v1660, %v1782
        %v1784 = vpop.f32.mrb[0].mxu0
        %1785 = vmatprep.mubr.f32.mxu0 0.0
        %1786 = vmatmul.mubr.f32.gmra.mrb[0].mxu0 %v1620
        %v1787 = vpop.f32.mrb[0].mxu0
        %v1788 = vadd.f32 %v1660, %v1787
        %v1789 = vpop.f32.mrb[0].mxu0
        %1790 = vmatprep.mubr.f32.mxu0 0.0
        %1791 = vmatmul.mubr.f32.gmra.mrb[0].mxu0 %v1621
        %v1792 = vpop.f32.mrb[0].mxu0
        %v1793 = vadd.f32 %v1660, %v1792
        %v1794 = vpop.f32.mrb[0].mxu0
        %1795 = vmatprep.mubr.f32.mxu0 0.0
        %1796 = vmatmul.mubr.f32.gmra.mrb[0].mxu0 %v1622
        %v1797 = vpop.f32.mrb[0].mxu0
        %v1798 = vadd.f32 %v1660, %v1797
        %v1799 = vpop.f32.mrb[0].mxu0
        %1800 = vmatprep.mubr.f32.mxu0 0.0
        %1801 = vmatmul.mubr.f32.gmra.mrb[0].mxu0 %v1623
        %v1802 = vpop.f32.mrb[0].mxu0
        %v1803 = vadd.f32 %v1660, %v1802
        %v1804 = vpop.f32.mrb[0].mxu0
        %1805 = vmatprep.mubr.f32.mxu0 0.0
        %1806 = vmatmul.mubr.f32.gmra.mrb[0].mxu0 %v1624
        %v1807 = vpop.f32.mrb[0].mxu0
        %v1808 = vadd.f32 %v1660, %v1807
        %v1809 = vpop.f32.mrb[0].mxu0
        %1810 = vmatprep.mubr.f32.mxu0 0.0
        %1811 = vmatmul.mubr.f32.gmra.mrb[0].mxu0 %v1625
        %v1812 = vpop.f32.mrb[0].mxu0
        %v1813 = vadd.f32 %v1660, %v1812
        %v1814 = vpop.f32.mrb[0].mxu0
        %1815 = vmatprep.mubr.f32.mxu0 0.0
        %1816 = vmatmul.mubr.f32.gmra.mrb[0].mxu0 %v1626
        %v1817 = vpop.f32.mrb[0].mxu0
        %v1818 = vadd.f32 %v1660, %v1817
        %v1819 = vpop.f32.mrb[0].mxu0
        %1820 = vmatprep.mubr.f32.mxu0 0.0
        %1821 = vmatmul.mubr.f32.gmra.mrb[0].mxu0 %v1627
        %v1822 = vpop.f32.mrb[0].mxu0
        %v1823 = vadd.f32 %v1660, %v1822
        %v1824 = vpop.f32.mrb[0].mxu0
        %1825 = vmatprep.mubr.f32.mxu0 0.0
        %1826 = vmatmul.mubr.f32.gmra.mrb[0].mxu0 %v1628
        %v1827 = vpop.f32.mrb[0].mxu0
        %v1828 = vadd.f32 %v1660, %v1827
        %v1829 = vpop.f32.mrb[0].mxu0
        %1830 = vmatprep.mubr.f32.mxu0 0.0
        %1831 = vmatmul.mubr.f32.gmra.mrb[0].mxu0 %v1629
        %v1832 = vpop.f32.mrb[0].mxu0
        %v1833 = vadd.f32 %v1660, %v1832
        %v1834 = vpop.f32.mrb[0].mxu0
        %1835 = vmatprep.mubr.f32.mxu0 0.0
        %1836 = vmatmul.mubr.f32.gmra.mrb[0].mxu0 %v1630
        %v1837 = vpop.f32.mrb[0].mxu0
        %v1838 = vadd.f32 %v1660, %v1837
        %v1839 = vpop.f32.mrb[0].mxu0
        %1840 = vmatprep.mubr.f32.mxu0 0.0
        %1841 = vmatmul.mubr.f32.gmra.mrb[0].mxu0 %v1631
        %v1842 = vpop.f32.mrb[0].mxu0
        %v1843 = vadd.f32 %v1660, %v1842
        %v1844 = vpop.f32.mrb[0].mxu0
        %1845 = vmatprep.mubr.f32.mxu0 0.0
        %1846 = vmatmul.mubr.f32.gmra.mrb[0].mxu0 %v1632
        %v1847 = vpop.f32.mrb[0].mxu0
        %v1848 = vadd.f32 %v1660, %v1847
        %v1849 = vpop.f32.mrb[0].mxu0
        %1850 = vmatprep.mubr.f32.mxu0 0.0
        %1851 = vmatmul.mubr.f32.gmra.mrb[0].mxu0 %v1633
        %v1852 = vpop.f32.mrb[0].mxu0
        %v1853 = vadd.f32 %v1660, %v1852
        %v1854 = vpop.f32.mrb[0].mxu0
        %1855 = vmatprep.mubr.f32.mxu0 0.0
        %1856 = vmatmul.mubr.f32.gmra.mrb[0].mxu0 %v1634
        %v1857 = vpop.f32.mrb[0].mxu0
        %v1858 = vadd.f32 %v1660, %v1857
        %v1859 = vpop.f32.mrb[0].mxu0
        %1860 = vmatprep.mubr.f32.mxu0 0.0
        %1861 = vmatmul.mubr.f32.gmra.mrb[0].mxu0 %v1635
        %v1862 = vpop.f32.mrb[0].mxu0
        %v1863 = vadd.f32 %v1660, %v1862
        %v1864 = vpop.f32.mrb[0].mxu0
        %1865 = vmatprep.mubr.f32.mxu0 0.0
        %1866 = vmatmul.mubr.f32.gmra.mrb[0].mxu0 %v1636
        %v1867 = vpop.f32.mrb[0].mxu0
        %v1868 = vadd.f32 %v1660, %v1867
        %v1869 = vpop.f32.mrb[0].mxu0
        %1870 = vmatprep.mubr.f32.mxu0 0.0
        %1871 = vmatmul.mubr.f32.gmra.mrb[0].mxu0 %v1637
        %v1872 = vpop.f32.mrb[0].mxu0
        %v1873 = vadd.f32 %v1660, %v1872
        %v1874 = vpop.f32.mrb[0].mxu0
        %1875 = vmatprep.mubr.f32.mxu0 0.0
        %1876 = vmatmul.mubr.f32.gmra.mrb[0].mxu0 %v1638
        %v1877 = vpop.f32.mrb[0].mxu0
        %v1878 = vadd.f32 %v1660, %v1877
        %v1879 = vpop.f32.mrb[0].mxu0
        %1880 = vmatprep.mubr.f32.mxu0 0.0
        %1881 = vmatmul.mubr.f32.gmra.mrb[0].mxu0 %v1639
        %v1882 = vpop.f32.mrb[0].mxu0
        %v1883 = vadd.f32 %v1660, %v1882
        %v1884 = vpop.f32.mrb[0].mxu0
        %1885 = vdwg.mxu0
        %1886 = vst [vmem:[%s215] sm:$0xff] %v1728
        %1887 = vst [vmem:[%s215 + $0x8] sm:$0xff] %v1733
        %1888 = vst [vmem:[%s215 + $0x10] sm:$0xff] %v1738
        %1889 = vst [vmem:[%s215 + $0x18] sm:$0xff] %v1743
        %1890 = vst [vmem:[%s215 + $0x20] sm:$0xff] %v1748
        %1891 = vst [vmem:[%s215 + $0x28] sm:$0xff] %v1753
        %1892 = vst [vmem:[%s215 + $0x30] sm:$0xff] %v1758
        %1893 = vst [vmem:[%s215 + $0x38] sm:$0xff] %v1763
        %1894 = vst [vmem:[%s215 + $0x40] sm:$0xff] %v1768
        %1895 = vst [vmem:[%s215 + $0x48] sm:$0xff] %v1773
        %1896 = vst [vmem:[%s215 + $0x50] sm:$0xff] %v1778
        %1897 = vst [vmem:[%s215 + $0x58] sm:$0xff] %v1783
        %1898 = vst [vmem:[%s215 + $0x60] sm:$0xff] %v1788
        %1899 = vst [vmem:[%s215 + $0x68] sm:$0xff] %v1793
        %1900 = vst [vmem:[%s215 + $0x70] sm:$0xff] %v1798
        %1901 = vst [vmem:[%s215 + $0x78] sm:$0xff] %v1803
        %1902 = vst [vmem:[%s215 + $0x80] sm:$0xff] %v1808
        %1903 = vst [vmem:[%s215 + $0x88] sm:$0xff] %v1813
        %1904 = vst [vmem:[%s215 + $0x90] sm:$0xff] %v1818
        %1905 = vst [vmem:[%s215 + $0x98] sm:$0xff] %v1823
        %1906 = vst [vmem:[%s215 + $0xa0] sm:$0xff] %v1828
        %1907 = vst [vmem:[%s215 + $0xa8] sm:$0xff] %v1833
        %1908 = vst [vmem:[%s215 + $0xb0] sm:$0xff] %v1838
        %1909 = vst [vmem:[%s215 + $0xb8] sm:$0xff] %v1843
        %1910 = vst [vmem:[%s215 + $0xc0] sm:$0xff] %v1848
        %1911 = vst [vmem:[%s215 + $0xc8] sm:$0xff] %v1853
        %1912 = vst [vmem:[%s215 + $0xd0] sm:$0xff] %v1858
        %1913 = vst [vmem:[%s215 + $0xd8] sm:$0xff] %v1863
        %1914 = vst [vmem:[%s215 + $0xe0] sm:$0xff] %v1868
        %1915 = vst [vmem:[%s215 + $0xe8] sm:$0xff] %v1873
        %1916 = vst [vmem:[%s215 + $0xf0] sm:$0xff] %v1878
        %1917 = vst [vmem:[%s215 + $0xf8] sm:$0xff] %v1883
        %s1918 = sand.u32 %s97, 1
        %s1919 = scalar_lea.sflag [#allocation4], %s1918
        %s1920 = sand.u32 %s97, 1
        %s1921 = smul.addr %s1920, 256
        %s1922 = scalar_lea.vmem [#allocation8], %s1921
        // Predicated region
        $region45: #{tpu_custom_call.1} parent=31 // pred_check
          %p1923 = pneg %p107
        $region46: #{tpu_custom_call.1} parent=31 // pred_check_branch
          %1925 = sbr.rel (%p1923) target = $region48
        $region47: #{tpu_custom_call.1} parent=31 // pred_region
          %s1926 = smul.u32 32, %s21
          %s1928 = ssub.s32 4096, 4096
          %1929 = vsyncadd %s1919, %s1928
          %s1930 = smul.addr %s1926, 128
          %s1931 = scalar_lea.hbm %s3, %s1930
          %s1932 = sshll.u32 %s1922, 4
          %s1933 = int_to_ptr.vmem [resolvable:$true] %s1932
          %1938 = dma.vmem_to_hbm [thread:$0]  %s1933, 4096, %s1931, %s1919, 128, 128, 8
        $region48: #{tpu_custom_call.1} parent=31 // pred_fallthru
          _
      $region32: #{tpu_custom_call.1} parent=5 // pred_fallthru
        _
      %p1939 = scmp.le.s32.totalorder 2, %s16
      // Predicated region
      $region49: #{tpu_custom_call.1} parent=5 // pred_check
        %p1940 = pneg %p1939
      $region50: #{tpu_custom_call.1} parent=5 // pred_check_branch
        %1942 = sbr.rel (%p1940) target = $region52
      $region51: #{tpu_custom_call.1} parent=5 // pred_region
        %s1943 = ssub.s32 %s16, 2
        // Predicated region
        $region53: #{tpu_custom_call.1} parent=51 // pred_check
          %p1944 = pneg %p113
        $region54: #{tpu_custom_call.1} parent=51 // pred_check_branch
          %1946 = sbr.rel (%p1944) target = $region56
        $region55: #{tpu_custom_call.1} parent=51 // pred_region
          %s1947 = sand.u32 %s98, 1
          %s1948 = scalar_lea.sflag [#allocation4], %s1947
          %s1949 = sand.u32 %s98, 1
          %s1950 = smul.addr %s1949, 256
          %s1951 = scalar_lea.vmem [#allocation8], %s1950
          %1952 = dma.done %s1948, 4096
        $region56: #{tpu_custom_call.1} parent=51 // pred_fallthru
          _
      $region52: #{tpu_custom_call.1} parent=5 // pred_fallthru
        _
    $region6: #{tpu_custom_call.1} parent=1 // loop_footer
      %s20 = sadd.s32 1, %s16
    $region7: #{tpu_custom_call.1} parent=1 // loop_footer_branch
      %15 = sbr.rel target = $region3
    $region8: #{tpu_custom_call.1} parent=1 // loop_exit
      _
    %1953 = vsyncpa [#allocation3], 1
    %s1954 = scalar_lea.sflag [#allocation3], 1
    %1955 = vsyncpa %s1954, 1
    %1956 = vsyncpa [#allocation6], 1
    %1957 = vsyncpa [#allocation4], 1
    %s1958 = scalar_lea.sflag [#allocation4], 1
    %1959 = vsyncpa %s1958, 1

</llo_original>
